<compile_context>
chip_gen: v7x
topology: tpu7x:2x2x1
jax: 0.10.0
libtpu: 0.0.40
codegen_flags: <defaults>
</compile_context>

<pallas_src>
import jax
import jax.numpy as jnp
from jax import lax
from jax.experimental import pallas as pl
from jax.experimental.pallas import tpu as pltpu

_NEG_INF = float("-inf")


def _simclr_row_loss_kernel(zr_ref, zc_ref, zp_ref, o_ref, m_sc, l_sc):
    """One (row_tile, col_tile) grid step.

    zr_ref: (tm, D) pre-normalized rows (already scaled by 1/sqrt(T)) -- row tile i
    zc_ref: (tn, D) pre-normalized rows -- col tile j
    zp_ref: (tm, D) pre-normalized rows of the positive pairs of row tile i
    o_ref : (tm, 1) per-row loss, written only at the last column tile
    m_sc, l_sc: (tm, 1) running max / running sum for the online logsumexp
    """
    i = pl.program_id(0)
    j = pl.program_id(1)
    tm = zr_ref.shape[0]
    tn = zc_ref.shape[0]

    @pl.when(j == 0)
    def _():
        m_sc[...] = jnp.full_like(m_sc, _NEG_INF)
        l_sc[...] = jnp.zeros_like(l_sc)

    zr = zr_ref[...]                                        # (tm, D) f32

    # A @ B^T on the MXU without materializing a transpose; result is cos/T.
    s = lax.dot_general(
        zr, zc_ref[...],
        dimension_numbers=(((1,), (1,)), ((), ())),
        precision=lax.Precision.HIGHEST,
        preferred_element_type=jnp.float32,
    )                                                       # (tm, tn)

    # Exclude self-similarity (global diagonal) from the logits.
    # TODO(synk): only a small fraction of tiles intersect the diagonal; this
    # mask could be skipped on off-diagonal tiles, but the kernel is exp-bound
    # so the extra VPU passes are hidden.
    row_ids = i * tm + lax.broadcasted_iota(jnp.int32, (tm, tn), 0)
    col_ids = j * tn + lax.broadcasted_iota(jnp.int32, (tm, tn), 1)
    s = jnp.where(row_ids == col_ids, _NEG_INF, s)

    # Online logsumexp update (running max + rescaled running sum).
    m_prev = m_sc[...]
    m_new = jnp.maximum(m_prev, jnp.max(s, axis=-1, keepdims=True))
    l_sc[...] = l_sc[...] * jnp.exp(m_prev - m_new) + jnp.sum(
        jnp.exp(s - m_new), axis=-1, keepdims=True)
    m_sc[...] = m_new

    @pl.when(j == pl.num_programs(1) - 1)
    def _():
        lse = m_sc[...] + jnp.log(l_sc[...])                          # (tm, 1)
        # positive_i = cos(z_i, z_pair(i)) / T  (both operands carry 1/sqrt(T))
        pos = jnp.sum(zr * zp_ref[...], axis=-1, keepdims=True)       # (tm, 1)
        o_ref[...] = lse - pos


def _largest_divisor(n, cap, unit):
    """Largest multiple of `unit` that divides `n` and is <= cap (or None)."""
    d = (min(cap, n) // unit) * unit
    while d >= unit:
        if n % d == 0:
            return d
        d -= unit
    return None


def simclr_loss(z_i, z_j, temperature, *, block_rows=256, block_cols=512):
    """Pallas TPU implementation of SimCLR_Loss.forward (scalar loss)."""
    assert z_i.shape == z_j.shape and z_i.ndim == 2
    B, D = z_i.shape
    assert B % 8 == 0, "batch_size must be a multiple of 8 for TPU tiling"
    N = 2 * B

    # Concatenate, normalize each row (clamped), fold in 1/sqrt(T).  XLA fuses
    # this into a single O(N*D) pass; it removes every N x N divide from the
    # kernel and makes the MXU output already be cos_sim / T.
    z = jnp.concatenate([z_i, z_j], axis=0).astype(jnp.float32)
    sq = jnp.sum(z * z, axis=-1, keepdims=True)
    inv_sqrt_t = 1.0 / float(temperature) ** 0.5
    z_hat = z * lax.rsqrt(jnp.maximum(sq, 1e-8)) * jnp.float32(inv_sqrt_t)

    # MXU / lane aligned tile sizes that divide the problem exactly.
    tm = _largest_divisor(B, block_rows, 8)          # rows per tile (divides B)
    tn = _largest_divisor(N, block_cols, 128) or N   # cols per tile (lane dense)
    nrt = N // tm
    nct = N // tn
    pair_shift = B // tm                             # row tile i pairs with i +/- B/tm

    per_row = pl.pallas_call(
        _simclr_row_loss_kernel,
        out_shape=jax.ShapeDtypeStruct((N, 1), jnp.float32),
        grid_spec=pltpu.PrefetchScalarGridSpec(
            num_scalar_prefetch=0,
            grid=(nrt, nct),
            in_specs=[
                pl.BlockSpec((tm, D), lambda i, j: (i, 0)),                       # row tile
                pl.BlockSpec((tn, D), lambda i, j: (j, 0)),                       # col tile
                pl.BlockSpec((tm, D), lambda i, j: ((i + pair_shift) % nrt, 0)),  # positive pair tile
            ],
            out_specs=pl.BlockSpec((tm, 1), lambda i, j: (i, 0)),
            scratch_shapes=[
                pltpu.VMEM((tm, 1), jnp.float32),   # running max
                pltpu.VMEM((tm, 1), jnp.float32),   # running sum
            ],
        ),
        compiler_params=pltpu.CompilerParams(
            dimension_semantics=("parallel", "arbitrary"),
            vmem_limit_bytes=32 * 1024 * 1024,
        ),
    )(z_hat, z_hat, z_hat)

    return jnp.sum(per_row) / jnp.float32(N)


def _reference_loss(z_i, z_j, temperature):
    """Pure-JAX reference matching the PyTorch module semantics."""
    B = z_i.shape[0]
    N = 2 * B
    z = jnp.concatenate([z_i, z_j], axis=0).astype(jnp.float32)
    norm = jnp.sqrt(jnp.sum(z * z, axis=-1, keepdims=True))
    dots = jnp.dot(z, z.T, precision=lax.Precision.HIGHEST)
    sim = dots / jnp.maximum(norm * norm.T, 1e-8) / temperature
    idx = jnp.arange(N)
    pos_col = jnp.where(idx < B, idx + B, idx - B)
    positives = sim[idx, pos_col]
    masked = jnp.where(jnp.eye(N, dtype=bool), -jnp.inf, sim)
    lse = jax.scipy.special.logsumexp(masked, axis=-1)
    return jnp.sum(lse - positives) / N


if __name__ == "__main__":
    key = jax.random.PRNGKey(0)
    batch_size, dim, temperature = 128, 32, 0.5
    k1, k2 = jax.random.split(key)
    z_i = jax.random.normal(k1, (batch_size, dim), dtype=jnp.float32)
    z_j = jax.random.normal(k2, (batch_size, dim), dtype=jnp.float32)

    # Small block sizes so the test exercises a real (4 x 2) tiled grid.
    loss = jax.block_until_ready(
        simclr_loss(z_i, z_j, temperature, block_rows=64, block_cols=128))
    ref = jax.block_until_ready(_reference_loss(z_i, z_j, temperature))

    assert jnp.isfinite(loss), "loss is not finite"
    assert jnp.allclose(loss, ref, rtol=1e-4, atol=1e-4), (loss, ref)
    print("KERNEL_OK")
</pallas_src>

<mosaic_0001>
module attributes {stable_mosaic.version = 11 : i64} {
  func.func @_simclr_row_loss_kernel(%arg0: i32, %arg1: i32, %arg2: memref<64x32xf32, #tpu.memory_space<vmem>>, %arg3: memref<128x32xf32, #tpu.memory_space<vmem>>, %arg4: memref<64x32xf32, #tpu.memory_space<vmem>>, %arg5: memref<64x1xf32, #tpu.memory_space<vmem>>, %arg6: memref<64x1xf32, #tpu.memory_space<vmem>>, %arg7: memref<64x1xf32, #tpu.memory_space<vmem>>) attributes {dimension_semantics = [#tpu.dimension_semantics<parallel>, #tpu.dimension_semantics<arbitrary>], iteration_bounds = array<i64: 4, 2>, scalar_prefetch = 0 : i64, scratch_operands = 2 : i64, tpu.core_type = #tpu.core_type<tc>, window_params = [{transform_indices = @transform_0, window_bounds = array<i64: 64, 32>}, {transform_indices = @transform_1, window_bounds = array<i64: 128, 32>}, {transform_indices = @transform_2, window_bounds = array<i64: 64, 32>}, {transform_indices = @transform_3, window_bounds = array<i64: 64, 1>}]} {
    %c0_i32 = arith.constant 0 : i32
    %0 = arith.cmpi eq, %arg1, %c0_i32 : i32
    %1 = arith.extui %0 : i1 to i32
    %c0_i32_0 = arith.constant 0 : i32
    %2 = arith.cmpi ne, %1, %c0_i32_0 : i32
    scf.if %2 {
      %cst_16 = arith.constant 0xFF800000 : f32
      %36 = vector.broadcast %cst_16 : f32 to vector<64x1xf32>
      %c0_17 = arith.constant 0 : index
      %c0_18 = arith.constant 0 : index
      %37 = vector.load %arg6[%c0_17, %c0_18] : memref<64x1xf32, #tpu.memory_space<vmem>>, vector<64x1xf32>
      tpu.vector_store %arg6[%c0_17, %c0_18], %36 {strides = array<i32>} : memref<64x1xf32, #tpu.memory_space<vmem>>, vector<64x1xf32>,
      %cst_19 = arith.constant 0.000000e+00 : f32
      %38 = vector.broadcast %cst_19 : f32 to vector<64x1xf32>
      %c0_20 = arith.constant 0 : index
      %c0_21 = arith.constant 0 : index
      %39 = vector.load %arg7[%c0_20, %c0_21] : memref<64x1xf32, #tpu.memory_space<vmem>>, vector<64x1xf32>
      tpu.vector_store %arg7[%c0_20, %c0_21], %38 {strides = array<i32>} : memref<64x1xf32, #tpu.memory_space<vmem>>, vector<64x1xf32>,
    } else {
    }
    %c0 = arith.constant 0 : index
    %c0_1 = arith.constant 0 : index
    %3 = vector.load %arg2[%c0, %c0_1] : memref<64x32xf32, #tpu.memory_space<vmem>>, vector<64x32xf32>
    %c0_2 = arith.constant 0 : index
    %c0_3 = arith.constant 0 : index
    %4 = vector.load %arg3[%c0_2, %c0_3] : memref<128x32xf32, #tpu.memory_space<vmem>>, vector<128x32xf32>
    %cst = arith.constant dense<0.000000e+00> : vector<64x128xf32>
    %5 = tpu.matmul %3, %4, %cst {dimension_numbers = #tpu.dot_dimension_numbers<[1], [1], [0], [0], [0, 0, 1, 0], [], []>, precision = #tpu.contract_precision<fp32>} : vector<64x32xf32>, vector<128x32xf32>, vector<64x128xf32> -> vector<64x128xf32>
    %c64_i32 = arith.constant 64 : i32
    %6 = arith.muli %arg0, %c64_i32 : i32
    %7 = tpu.iota {dimensions = array<i32: 0>} : vector<64x128xi32>
    %8 = vector.broadcast %6 : i32 to vector<64x128xi32>
    %9 = arith.addi %8, %7 : vector<64x128xi32>
    %c128_i32 = arith.constant 128 : i32
    %10 = arith.muli %arg1, %c128_i32 : i32
    %11 = tpu.iota {dimensions = array<i32: 1>} : vector<64x128xi32>
    %12 = vector.broadcast %10 : i32 to vector<64x128xi32>
    %13 = arith.addi %12, %11 : vector<64x128xi32>
    %14 = arith.cmpi eq, %9, %13 : vector<64x128xi32>
    %cst_4 = arith.constant 0xFF800000 : f32
    %15 = vector.broadcast %cst_4 : f32 to vector<64x128xf32>
    %16 = arith.select %14, %15, %5 : vector<64x128xi1>, vector<64x128xf32>
    %c0_5 = arith.constant 0 : index
    %c0_6 = arith.constant 0 : index
    %17 = vector.load %arg6[%c0_5, %c0_6] : memref<64x1xf32, #tpu.memory_space<vmem>>, vector<64x1xf32>
    %cst_7 = arith.constant dense<0xFF800000> : vector<64xf32>
    %18 = vector.multi_reduction <maximumf>, %16, %cst_7 [1] : vector<64x128xf32> to vector<64xf32>
    %19 = vector.shape_cast %18 : vector<64xf32> to vector<64x1xf32>
    %20 = arith.maximumf %17, %19 : vector<64x1xf32>
    %c0_8 = arith.constant 0 : index
    %c0_9 = arith.constant 0 : index
    %21 = vector.load %arg7[%c0_8, %c0_9] : memref<64x1xf32, #tpu.memory_space<vmem>>, vector<64x1xf32>
    %22 = arith.subf %17, %20 : vector<64x1xf32>
    %23 = math.exp %22 : vector<64x1xf32>
    %24 = arith.mulf %21, %23 : vector<64x1xf32>
    %25 = vector.broadcast %20 : vector<64x1xf32> to vector<64x128xf32>
    %26 = arith.subf %16, %25 : vector<64x128xf32>
    %27 = math.exp %26 : vector<64x128xf32>
    %cst_10 = arith.constant dense<0.000000e+00> : vector<64xf32>
    %28 = vector.multi_reduction <add>, %27, %cst_10 [1] : vector<64x128xf32> to vector<64xf32>
    %29 = vector.shape_cast %28 : vector<64xf32> to vector<64x1xf32>
    %30 = arith.addf %24, %29 : vector<64x1xf32>
    %c0_11 = arith.constant 0 : index
    %c0_12 = arith.constant 0 : index
    %31 = vector.load %arg7[%c0_11, %c0_12] : memref<64x1xf32, #tpu.memory_space<vmem>>, vector<64x1xf32>
    tpu.vector_store %arg7[%c0_11, %c0_12], %30 {strides = array<i32>} : memref<64x1xf32, #tpu.memory_space<vmem>>, vector<64x1xf32>,
    %c0_13 = arith.constant 0 : index
    %c0_14 = arith.constant 0 : index
    %32 = vector.load %arg6[%c0_13, %c0_14] : memref<64x1xf32, #tpu.memory_space<vmem>>, vector<64x1xf32>
    tpu.vector_store %arg6[%c0_13, %c0_14], %20 {strides = array<i32>} : memref<64x1xf32, #tpu.memory_space<vmem>>, vector<64x1xf32>,
    %c1_i32 = arith.constant 1 : i32
    %33 = arith.cmpi eq, %arg1, %c1_i32 : i32
    %34 = arith.extui %33 : i1 to i32
    %c0_i32_15 = arith.constant 0 : i32
    %35 = arith.cmpi ne, %34, %c0_i32_15 : i32
    scf.if %35 {
      %c0_16 = arith.constant 0 : index
      %c0_17 = arith.constant 0 : index
      %36 = vector.load %arg6[%c0_16, %c0_17] : memref<64x1xf32, #tpu.memory_space<vmem>>, vector<64x1xf32>
      %c0_18 = arith.constant 0 : index
      %c0_19 = arith.constant 0 : index
      %37 = vector.load %arg7[%c0_18, %c0_19] : memref<64x1xf32, #tpu.memory_space<vmem>>, vector<64x1xf32>
      %38 = math.log %37 : vector<64x1xf32>
      %39 = arith.addf %36, %38 : vector<64x1xf32>
      %c0_20 = arith.constant 0 : index
      %c0_21 = arith.constant 0 : index
      %40 = vector.load %arg4[%c0_20, %c0_21] : memref<64x32xf32, #tpu.memory_space<vmem>>, vector<64x32xf32>
      %41 = arith.mulf %3, %40 : vector<64x32xf32>
      %cst_22 = arith.constant dense<0.000000e+00> : vector<64xf32>
      %42 = vector.multi_reduction <add>, %41, %cst_22 [1] : vector<64x32xf32> to vector<64xf32>
      %43 = vector.shape_cast %42 : vector<64xf32> to vector<64x1xf32>
      %44 = arith.subf %39, %43 : vector<64x1xf32>
      %c0_23 = arith.constant 0 : index
      %c0_24 = arith.constant 0 : index
      %45 = vector.load %arg5[%c0_23, %c0_24] : memref<64x1xf32, #tpu.memory_space<vmem>>, vector<64x1xf32>
      tpu.vector_store %arg5[%c0_23, %c0_24], %44 {strides = array<i32>} : memref<64x1xf32, #tpu.memory_space<vmem>>, vector<64x1xf32>,
    } else {
    }
    return
  }
  func.func @transform_0(%arg0: i32, %arg1: i32) -> (i32, i32) {
    %c0_i32 = arith.constant 0 : i32
    %c0_i32_0 = arith.constant 0 : i32
    return %arg0, %c0_i32 : i32, i32
  }
  func.func @transform_1(%arg0: i32, %arg1: i32) -> (i32, i32) {
    %c0_i32 = arith.constant 0 : i32
    %c0_i32_0 = arith.constant 0 : i32
    return %arg1, %c0_i32 : i32, i32
  }
  func.func @transform_2(%arg0: i32, %arg1: i32) -> (i32, i32) {
    %c2_i32 = arith.constant 2 : i32
    %0 = arith.addi %arg0, %c2_i32 : i32
    %c4_i32 = arith.constant 4 : i32
    %c0_i32 = arith.constant 0 : i32
    %1 = arith.cmpi eq, %c4_i32, %c0_i32 : i32
    %c1_i32 = arith.constant 1 : i32
    %2 = arith.select %1, %c1_i32, %c4_i32 : i32
    %3 = arith.remsi %0, %2 : i32
    %c0_i32_0 = arith.constant 0 : i32
    %4 = arith.cmpi ne, %3, %c0_i32_0 : i32
    %c0_i32_1 = arith.constant 0 : i32
    %5 = arith.cmpi slt, %3, %c0_i32_1 : i32
    %c0_i32_2 = arith.constant 0 : i32
    %6 = arith.cmpi slt, %2, %c0_i32_2 : i32
    %7 = arith.xori %5, %6 : i1
    %8 = arith.andi %7, %4 : i1
    %9 = arith.addi %3, %2 : i32
    %10 = arith.select %8, %9, %3 : i32
    %c0_i32_3 = arith.constant 0 : i32
    %c0_i32_4 = arith.constant 0 : i32
    return %10, %c0_i32_3 : i32, i32
  }
  func.func @transform_3(%arg0: i32, %arg1: i32) -> (i32, i32) {
    %c0_i32 = arith.constant 0 : i32
    %c0_i32_0 = arith.constant 0 : i32
    return %arg0, %c0_i32 : i32, i32
  }
}

</mosaic_0001>

<llo_original>
// kernel: tpu_custom_call.1
$region0: #{tpu_custom_call.1}
  #allocation0 [shape = 'u32[]', space=smem, size = 0x4, offset = 0x4, fixed_abs, tag = 'smem constant byte address 0x4 - core index']
  #allocation1 [shape = 'u32[144,128]{1,0:T(1,128)}', space=vmem, size = 0x12000, scoped, tag = 'internal scratch']
  #allocation2 [shape = 'f32[64,1]{1,0:T(8,128)}', space=vmem, size = 0x8000, scoped, tag = 'scratch operand']
  #allocation3 [shape = 'f32[64,1]{1,0:T(8,128)}', space=vmem, size = 0x8000, scoped, tag = 'scratch operand']
  %s0 = inlined_call_operand.vmem [shape: f32[256,32], index: 0, kind: input, shape index: {}]
  %s1 = inlined_call_operand.vmem [shape: f32[256,32], index: 1, kind: input, shape index: {}]
  %s2 = inlined_call_operand.vmem [shape: f32[256,32], index: 2, kind: input, shape index: {}]
  %s3 = inlined_call_operand.vmem [shape: f32[256,1], index: 3, kind: output, shape index: {}]
  %s4 = sld [smem:[#allocation0]]
  $region53: #{tpu_custom_call.1} parent=0
    _
  %s6 = ssub.s32 1, %s4
  %s7 = scalar_select 0, %s6, %s4
  loop: start=0, step=1, limit=10
  $region2: #{tpu_custom_call.1} parent=0 // loop_pre_header
    _
  $region3: #{tpu_custom_call.1} parent=0 // loop_header
    %s9 = sphi 0, %s13
    %p10 = scmp.ge.s32.totalorder %s9, 10
    %s16 = sphi 0, %s28
    %s17 = sphi 0, %s24
    %s18 = sphi 0, %s16
    %s19 = sphi 0, %s17
    %s20 = sphi 0, %s18
    %s21 = sphi 0, %s19
    %s31 = sphi 0, %s33
    %s34 = sphi 0, %s31
    %s35 = sphi 0, %s34
    %s51 = sphi 0, %s35
    %s57 = sphi 0, %s59
    %s60 = sphi 0, %s57
    %s61 = sphi 0, %s60
    %s77 = sphi 0, %s61
    %s109 = sphi 0, %s111
    %s112 = sphi 0, %s109
    %s113 = sphi 0, %s112
    %s129 = sphi 0, %s113
    %s135 = sphi 0, %s137
    %s138 = sphi 0, %s135
    %s139 = sphi 0, %s138
    %s155 = sphi 0, %s139
  $region4: #{tpu_custom_call.1} parent=0 // loop_header_branch
    %12 = sbr.rel (%p10) target = $region8
  $region5: #{tpu_custom_call.1} parent=0 // loop_body
    %s14 = ssub.s32 %s9, 1
    %s15 = ssub.s32 %s9, 2
    %s22 = sadd.s32 1, %s17
    %p23 = scmp.ge.s32.totalorder %s22, 2
    %s24 = scalar_select %p23, 0, %s22
    %s25 = sadd.s32 1, %s16
    %s26 = scalar_select %p23, %s25, %s16
    %p27 = scmp.ge.s32.totalorder %s26, 4
    %s28 = scalar_select %p27, 0, %s26
    %s29 = ssub.s32 %s16, %s28
    %p30 = scmp.eq.s32.totalorder %s29, 0
    %s32 = sadd.s32 %s31, 1
    %s33 = scalar_select %p30, %s31, %s32
    %p36 = pneg %p30
    %p37 = scmp.eq.s32.totalorder %s9, 7
    %p38 = por %p36, %p37
    %p39 = scmp.ne.s32.totalorder %s31, %s34
    %p40 = scmp.eq.s32.totalorder %s9, 0
    %p41 = por %p39, %p40
    %p42 = scmp.ne.s32.totalorder %s31, %s34
    %p43 = scmp.eq.s32.totalorder %s14, 7
    %p44 = por %p42, %p43
    %p45 = scmp.ne.s32.totalorder %s34, %s35
    %p46 = scmp.eq.s32.totalorder %s14, 0
    %p47 = por %p45, %p46
    %p48 = scmp.ne.s32.totalorder %s34, %s35
    %p49 = scmp.eq.s32.totalorder %s15, 7
    %p50 = por %p48, %p49
    %p52 = scmp.ne.s32.totalorder %s35, %s51
    %p53 = scmp.eq.s32.totalorder %s15, 0
    %p54 = por %p52, %p53
    %s55 = ssub.s32 %s17, %s24
    %p56 = scmp.eq.s32.totalorder %s55, 0
    %s58 = sadd.s32 %s57, 1
    %s59 = scalar_select %p56, %s57, %s58
    %p62 = pneg %p56
    %p63 = scmp.eq.s32.totalorder %s9, 7
    %p64 = por %p62, %p63
    %p65 = scmp.ne.s32.totalorder %s57, %s60
    %p66 = scmp.eq.s32.totalorder %s9, 0
    %p67 = por %p65, %p66
    %p68 = scmp.ne.s32.totalorder %s57, %s60
    %p69 = scmp.eq.s32.totalorder %s14, 7
    %p70 = por %p68, %p69
    %p71 = scmp.ne.s32.totalorder %s60, %s61
    %p72 = scmp.eq.s32.totalorder %s14, 0
    %p73 = por %p71, %p72
    %p74 = scmp.ne.s32.totalorder %s60, %s61
    %p75 = scmp.eq.s32.totalorder %s15, 7
    %p76 = por %p74, %p75
    %p78 = scmp.ne.s32.totalorder %s61, %s77
    %p79 = scmp.eq.s32.totalorder %s15, 0
    %p80 = por %p78, %p79
    %s81 = sadd.s32 %s16, 2
    %p82 = scmp.lt.s32.totalorder %s81, 0
    %s83 = ssub.s32 0, %s81
    %s84 = scalar_select %p82, %s83, %s81
    %s85 = sand.u32 %s84, 3
    %s86 = ssub.s32 0, %s85
    %s87 = scalar_select %p82, %s86, %s85
    %p88 = scmp.ne.s32.totalorder %s87, 0
    %p89 = scmp.lt.s32.totalorder %s87, 0
    %p90 = pnand %p89, %p88
    %p91 = pneg %p90
    %s92 = sadd.s32 %s87, 4
    %s93 = scalar_select %p91, %s92, %s87
    %s94 = sadd.s32 %s28, 2
    %p95 = scmp.lt.s32.totalorder %s94, 0
    %s96 = ssub.s32 0, %s94
    %s97 = scalar_select %p95, %s96, %s94
    %s98 = sand.u32 %s97, 3
    %s99 = ssub.s32 0, %s98
    %s100 = scalar_select %p95, %s99, %s98
    %p101 = scmp.ne.s32.totalorder %s100, 0
    %p102 = scmp.lt.s32.totalorder %s100, 0
    %p103 = pnand %p102, %p101
    %p104 = pneg %p103
    %s105 = sadd.s32 %s100, 4
    %s106 = scalar_select %p104, %s105, %s100
    %s107 = ssub.s32 %s93, %s106
    %p108 = scmp.eq.s32.totalorder %s107, 0
    %s110 = sadd.s32 %s109, 1
    %s111 = scalar_select %p108, %s109, %s110
    %p114 = pneg %p108
    %p115 = scmp.eq.s32.totalorder %s9, 7
    %p116 = por %p114, %p115
    %p117 = scmp.ne.s32.totalorder %s109, %s112
    %p118 = scmp.eq.s32.totalorder %s9, 0
    %p119 = por %p117, %p118
    %p120 = scmp.ne.s32.totalorder %s109, %s112
    %p121 = scmp.eq.s32.totalorder %s14, 7
    %p122 = por %p120, %p121
    %p123 = scmp.ne.s32.totalorder %s112, %s113
    %p124 = scmp.eq.s32.totalorder %s14, 0
    %p125 = por %p123, %p124
    %p126 = scmp.ne.s32.totalorder %s112, %s113
    %p127 = scmp.eq.s32.totalorder %s15, 7
    %p128 = por %p126, %p127
    %p130 = scmp.ne.s32.totalorder %s113, %s129
    %p131 = scmp.eq.s32.totalorder %s15, 0
    %p132 = por %p130, %p131
    %s133 = ssub.s32 %s16, %s28
    %p134 = scmp.eq.s32.totalorder %s133, 0
    %s136 = sadd.s32 %s135, 1
    %s137 = scalar_select %p134, %s135, %s136
    %p140 = pneg %p134
    %p141 = scmp.eq.s32.totalorder %s9, 7
    %p142 = por %p140, %p141
    %p143 = scmp.ne.s32.totalorder %s135, %s138
    %p144 = scmp.eq.s32.totalorder %s9, 0
    %p145 = por %p143, %p144
    %p146 = scmp.ne.s32.totalorder %s135, %s138
    %p147 = scmp.eq.s32.totalorder %s14, 7
    %p148 = por %p146, %p147
    %p149 = scmp.ne.s32.totalorder %s138, %s139
    %p150 = scmp.eq.s32.totalorder %s14, 0
    %p151 = por %p149, %p150
    %p152 = scmp.ne.s32.totalorder %s138, %s139
    %p153 = scmp.eq.s32.totalorder %s15, 7
    %p154 = por %p152, %p153
    %p156 = scmp.ne.s32.totalorder %s139, %s155
    %p157 = scmp.eq.s32.totalorder %s15, 0
    %p158 = por %p156, %p157
    %p159 = scmp.le.s32.totalorder 1, %s9
    %p160 = scmp.lt.s32.totalorder %s9, 9
    %p161 = pnand %p159, %p160
    %p162 = pneg %p161
    // Predicated region
    $region9: #{tpu_custom_call.1} parent=5 // pred_check
      _
    $region10: #{tpu_custom_call.1} parent=5 // pred_check_branch
      %164 = sbr.rel (%p161) target = $region12
    $region11: #{tpu_custom_call.1} parent=5 // pred_region
      %s165 = ssub.s32 %s9, 1
    $region12: #{tpu_custom_call.1} parent=5 // pred_fallthru
      _
    %p166 = scmp.lt.s32.totalorder %s9, 8
    // Predicated region
    $region13: #{tpu_custom_call.1} parent=5 // pred_check
      %p167 = pneg %p166
    $region14: #{tpu_custom_call.1} parent=5 // pred_check_branch
      %169 = sbr.rel (%p167) target = $region16
    $region15: #{tpu_custom_call.1} parent=5 // pred_region
      // Predicated region
      $region17: #{tpu_custom_call.1} parent=15 // pred_check
        %p170 = pneg %p41
      $region18: #{tpu_custom_call.1} parent=15 // pred_check_branch
        %172 = sbr.rel (%p170) target = $region20
      $region19: #{tpu_custom_call.1} parent=15 // pred_region
        %s173 = smul.u32 8, %s16
        %p174 = scmp.lt.s32.totalorder %s173, 31
        %s175 = scalar_select %p174, %s173, 31
        %s176 = smul.addr %s175, 8
        %s177 = scalar_lea.vmem %s0, %s176
        %s178 = smul.u32 8, %s16
      $region20: #{tpu_custom_call.1} parent=15 // pred_fallthru
        _
      // Predicated region
      $region21: #{tpu_custom_call.1} parent=15 // pred_check
        %p179 = pneg %p67
      $region22: #{tpu_custom_call.1} parent=15 // pred_check_branch
        %181 = sbr.rel (%p179) target = $region24
      $region23: #{tpu_custom_call.1} parent=15 // pred_region
        %s182 = smul.u32 16, %s17
        %p183 = scmp.lt.s32.totalorder %s182, 31
        %s184 = scalar_select %p183, %s182, 31
        %s185 = smul.addr %s184, 8
        %s186 = scalar_lea.vmem %s1, %s185
        %s187 = smul.u32 16, %s17
      $region24: #{tpu_custom_call.1} parent=15 // pred_fallthru
        _
      // Predicated region
      $region25: #{tpu_custom_call.1} parent=15 // pred_check
        %p188 = pneg %p119
      $region26: #{tpu_custom_call.1} parent=15 // pred_check_branch
        %190 = sbr.rel (%p188) target = $region28
      $region27: #{tpu_custom_call.1} parent=15 // pred_region
        %s191 = sadd.s32 %s16, 2
        %p192 = scmp.lt.s32.totalorder %s191, 0
        %s193 = ssub.s32 0, %s191
        %s194 = scalar_select %p192, %s193, %s191
        %s195 = sand.u32 %s194, 3
        %s196 = ssub.s32 0, %s195
        %s197 = scalar_select %p192, %s196, %s195
        %p198 = scmp.ne.s32.totalorder %s197, 0
        %p199 = scmp.lt.s32.totalorder %s197, 0
        %p200 = pnand %p199, %p198
        %p201 = pneg %p200
        %s202 = sadd.s32 %s197, 4
        %s203 = scalar_select %p201, %s202, %s197
        %s204 = smul.u32 8, %s203
        %p205 = scmp.lt.s32.totalorder %s204, 31
        %s206 = scalar_select %p205, %s204, 31
        %s207 = smul.addr %s206, 8
        %s208 = scalar_lea.vmem %s2, %s207
        %s209 = sadd.s32 %s16, 2
        %p210 = scmp.lt.s32.totalorder %s209, 0
        %s211 = ssub.s32 0, %s209
        %s212 = scalar_select %p210, %s211, %s209
        %s213 = sand.u32 %s212, 3
        %s214 = ssub.s32 0, %s213
        %s215 = scalar_select %p210, %s214, %s213
        %p216 = scmp.ne.s32.totalorder %s215, 0
        %p217 = scmp.lt.s32.totalorder %s215, 0
        %p218 = pnand %p217, %p216
        %p219 = pneg %p218
        %s220 = sadd.s32 %s215, 4
        %s221 = scalar_select %p219, %s220, %s215
        %s222 = smul.u32 8, %s221
      $region28: #{tpu_custom_call.1} parent=15 // pred_fallthru
        _
    $region16: #{tpu_custom_call.1} parent=5 // pred_fallthru
      _
    %p223 = scmp.le.s32.totalorder 1, %s9
    %p224 = scmp.lt.s32.totalorder %s9, 9
    %p225 = pnand %p223, %p224
    %p226 = pneg %p225
    // Predicated region
    $region29: #{tpu_custom_call.1} parent=5 // pred_check
      _
    $region30: #{tpu_custom_call.1} parent=5 // pred_check_branch
      %228 = sbr.rel (%p225) target = $region32
    $region31: #{tpu_custom_call.1} parent=5 // pred_region
      %s229 = ssub.s32 %s9, 1
      %s230 = smul.u32 8, %s18
      %p231 = scmp.lt.s32.totalorder %s230, 31
      %s232 = scalar_select %p231, %s230, 31
      %s233 = smul.addr %s232, 8
      %s234 = scalar_lea.vmem %s0, %s233
      %p235 = pneg %p47
      %p236 = pneg %p44
      %s237 = smul.u32 16, %s19
      %p238 = scmp.lt.s32.totalorder %s237, 31
      %s239 = scalar_select %p238, %s237, 31
      %s240 = smul.addr %s239, 8
      %s241 = scalar_lea.vmem %s1, %s240
      %p242 = pneg %p73
      %p243 = pneg %p70
      %s244 = sadd.s32 %s18, 2
      %p245 = scmp.lt.s32.totalorder %s244, 0
      %s246 = ssub.s32 0, %s244
      %s247 = scalar_select %p245, %s246, %s244
      %s248 = sand.u32 %s247, 3
      %s249 = ssub.s32 0, %s248
      %s250 = scalar_select %p245, %s249, %s248
      %p251 = scmp.ne.s32.totalorder %s250, 0
      %p252 = scmp.lt.s32.totalorder %s250, 0
      %p253 = pnand %p252, %p251
      %p254 = pneg %p253
      %s255 = sadd.s32 %s250, 4
      %s256 = scalar_select %p254, %s255, %s250
      %s257 = smul.u32 8, %s256
      %p258 = scmp.lt.s32.totalorder %s257, 31
      %s259 = scalar_select %p258, %s257, 31
      %s260 = smul.addr %s259, 8
      %s261 = scalar_lea.vmem %s2, %s260
      %p262 = pneg %p125
      %p263 = pneg %p122
      %p264 = pneg %p151
      %p265 = pneg %p148
      %s266 = smul.u32 8, %s18
      %p267 = scmp.lt.s32.totalorder %s266, 31
      %s268 = scalar_select %p267, %s266, 31
      %s269 = smul.addr %s268, 8
      %s270 = scalar_lea.vmem %s3, %s269
      %s271 = smul.u32 8, %s18
      %p272 = scmp.lt.s32.totalorder %s271, 31
      %s273 = scalar_select %p272, %s271, 31
      %s274 = smul.addr %s273, 8
      %s275 = scalar_lea.vmem %s0, %s274
      %s276 = smul.u32 8, %s18
      %s277 = smul.u32 16, %s19
      %p278 = scmp.lt.s32.totalorder %s277, 31
      %s279 = scalar_select %p278, %s277, 31
      %s280 = smul.addr %s279, 8
      %s281 = scalar_lea.vmem %s1, %s280
      %s282 = smul.u32 16, %s19
      %s283 = sadd.s32 %s18, 2
      %p284 = scmp.lt.s32.totalorder %s283, 0
      %s285 = ssub.s32 0, %s283
      %s286 = scalar_select %p284, %s285, %s283
      %s287 = sand.u32 %s286, 3
      %s288 = ssub.s32 0, %s287
      %s289 = scalar_select %p284, %s288, %s287
      %p290 = scmp.ne.s32.totalorder %s289, 0
      %p291 = scmp.lt.s32.totalorder %s289, 0
      %p292 = pnand %p291, %p290
      %p293 = pneg %p292
      %s294 = sadd.s32 %s289, 4
      %s295 = scalar_select %p293, %s294, %s289
      %s296 = smul.u32 8, %s295
      %p297 = scmp.lt.s32.totalorder %s296, 31
      %s298 = scalar_select %p297, %s296, 31
      %s299 = smul.addr %s298, 8
      %s300 = scalar_lea.vmem %s2, %s299
      %s301 = sadd.s32 %s18, 2
      %p302 = scmp.lt.s32.totalorder %s301, 0
      %s303 = ssub.s32 0, %s301
      %s304 = scalar_select %p302, %s303, %s301
      %s305 = sand.u32 %s304, 3
      %s306 = ssub.s32 0, %s305
      %s307 = scalar_select %p302, %s306, %s305
      %p308 = scmp.ne.s32.totalorder %s307, 0
      %p309 = scmp.lt.s32.totalorder %s307, 0
      %p310 = pnand %p309, %p308
      %p311 = pneg %p310
      %s312 = sadd.s32 %s307, 4
      %s313 = scalar_select %p311, %s312, %s307
      %s314 = smul.u32 8, %s313
      %s315 = smul.u32 8, %s18
      %p316 = scmp.lt.s32.totalorder %s315, 31
      %s317 = scalar_select %p316, %s315, 31
      %s318 = smul.addr %s317, 8
      %s319 = scalar_lea.vmem %s3, %s318
      %s320 = smul.u32 8, %s18
      %p321 = scmp.eq.s32.totalorder %s19, 0
      // Predicated region
      $region33: #{tpu_custom_call.1} parent=31 // pred_check
        %p322 = pneg %p321
      $region34: #{tpu_custom_call.1} parent=31 // pred_check_branch
        %324 = sbr.rel (%p322) target = $region36
      $region35: #{tpu_custom_call.1} parent=31 // pred_region
        %vm325 = vcmask 7168
        %326 = vst.msk [vmem:[#allocation2] sm:$0xff] %vm325, -inf
        %327 = vst.msk [vmem:[#allocation2 + $0x8] sm:$0xff] %vm325, -inf
        %328 = vst.msk [vmem:[#allocation2 + $0x10] sm:$0xff] %vm325, -inf
        %329 = vst.msk [vmem:[#allocation2 + $0x18] sm:$0xff] %vm325, -inf
        %330 = vst.msk [vmem:[#allocation2 + $0x20] sm:$0xff] %vm325, -inf
        %331 = vst.msk [vmem:[#allocation2 + $0x28] sm:$0xff] %vm325, -inf
        %332 = vst.msk [vmem:[#allocation2 + $0x30] sm:$0xff] %vm325, -inf
        %333 = vst.msk [vmem:[#allocation2 + $0x38] sm:$0xff] %vm325, -inf
        %334 = vst.msk [vmem:[#allocation3] sm:$0xff] %vm325, 0.0
        %335 = vst.msk [vmem:[#allocation3 + $0x8] sm:$0xff] %vm325, 0.0
        %336 = vst.msk [vmem:[#allocation3 + $0x10] sm:$0xff] %vm325, 0.0
        %337 = vst.msk [vmem:[#allocation3 + $0x18] sm:$0xff] %vm325, 0.0
        %338 = vst.msk [vmem:[#allocation3 + $0x20] sm:$0xff] %vm325, 0.0
        %339 = vst.msk [vmem:[#allocation3 + $0x28] sm:$0xff] %vm325, 0.0
        %340 = vst.msk [vmem:[#allocation3 + $0x30] sm:$0xff] %vm325, 0.0
        %341 = vst.msk [vmem:[#allocation3 + $0x38] sm:$0xff] %vm325, 0.0
      $region36: #{tpu_custom_call.1} parent=31 // pred_fallthru
        _
      %v342 = vld [vmem:[%s275] sm:$0xff]
      %v343 = vld [vmem:[%s275 + $0x8] sm:$0xff]
      %v344 = vld [vmem:[%s275 + $0x10] sm:$0xff]
      %v345 = vld [vmem:[%s275 + $0x18] sm:$0xff]
      %v346 = vld [vmem:[%s275 + $0x20] sm:$0xff]
      %v347 = vld [vmem:[%s275 + $0x28] sm:$0xff]
      %v348 = vld [vmem:[%s275 + $0x30] sm:$0xff]
      %v349 = vld [vmem:[%s275 + $0x38] sm:$0xff]
      %v350 = vld [vmem:[%s281] sm:$0xff]
      %v351 = vld [vmem:[%s281 + $0x8] sm:$0xff]
      %v352 = vld [vmem:[%s281 + $0x10] sm:$0xff]
      %v353 = vld [vmem:[%s281 + $0x18] sm:$0xff]
      %v354 = vld [vmem:[%s281 + $0x20] sm:$0xff]
      %v355 = vld [vmem:[%s281 + $0x28] sm:$0xff]
      %v356 = vld [vmem:[%s281 + $0x30] sm:$0xff]
      %v357 = vld [vmem:[%s281 + $0x38] sm:$0xff]
      %v358 = vld [vmem:[%s281 + $0x40] sm:$0xff]
      %v359 = vld [vmem:[%s281 + $0x48] sm:$0xff]
      %v360 = vld [vmem:[%s281 + $0x50] sm:$0xff]
      %v361 = vld [vmem:[%s281 + $0x58] sm:$0xff]
      %v362 = vld [vmem:[%s281 + $0x60] sm:$0xff]
      %v363 = vld [vmem:[%s281 + $0x68] sm:$0xff]
      %v364 = vld [vmem:[%s281 + $0x70] sm:$0xff]
      %v365 = vld [vmem:[%s281 + $0x78] sm:$0xff]
      %vm366 = vcmask 261120
      %v368 = vsel %vm366, %v342, 0
      %v371 = vsel %vm366, %v343, 0
      %v374 = vsel %vm366, %v344, 0
      %v377 = vsel %vm366, %v345, 0
      %v380 = vsel %vm366, %v346, 0
      %v383 = vsel %vm366, %v347, 0
      %v386 = vsel %vm366, %v348, 0
      %v389 = vsel %vm366, %v349, 0
      %v392 = vsel %vm366, %v350, 0
      %v395 = vsel %vm366, %v351, 0
      %v398 = vsel %vm366, %v352, 0
      %v401 = vsel %vm366, %v353, 0
      %v404 = vsel %vm366, %v354, 0
      %v407 = vsel %vm366, %v355, 0
      %v410 = vsel %vm366, %v356, 0
      %v413 = vsel %vm366, %v357, 0
      %v416 = vsel %vm366, %v358, 0
      %v419 = vsel %vm366, %v359, 0
      %v422 = vsel %vm366, %v360, 0
      %v425 = vsel %vm366, %v361, 0
      %v428 = vsel %vm366, %v362, 0
      %v431 = vsel %vm366, %v363, 0
      %v434 = vsel %vm366, %v364, 0
      %v437 = vsel %vm366, %v365, 0
      %439 = vmatprep.subr.mxu0 0.0
      %v440 = vand.u32 %v392, 4294901760
      %441 = vmatpush1.xpose.msra.mxu0 %v440
      %442 = vmatprep.subr.mxu0 0.0
      %v443 = vand.u32 %v395, 4294901760
      %444 = vmatpush1.xpose.msra.mxu0 %v443
      %445 = vmatprep.subr.mxu0 0.0
      %v446 = vand.u32 %v398, 4294901760
      %447 = vmatpush1.xpose.msra.mxu0 %v446
      %448 = vmatprep.subr.mxu0 0.0
      %v449 = vand.u32 %v401, 4294901760
      %450 = vmatpush1.xpose.msra.mxu0 %v449
      %451 = vmatprep.subr.mxu0 0.0
      %v452 = vand.u32 %v404, 4294901760
      %453 = vmatpush1.xpose.msra.mxu0 %v452
      %454 = vmatprep.subr.mxu0 0.0
      %v455 = vand.u32 %v407, 4294901760
      %456 = vmatpush1.xpose.msra.mxu0 %v455
      %457 = vmatprep.subr.mxu0 0.0
      %v458 = vand.u32 %v410, 4294901760
      %459 = vmatpush1.xpose.msra.mxu0 %v458
      %460 = vmatprep.subr.mxu0 0.0
      %v461 = vand.u32 %v413, 4294901760
      %462 = vmatpush1.xpose.msra.mxu0 %v461
      %463 = vmatprep.subr.mxu0 0.0
      %v464 = vand.u32 %v416, 4294901760
      %465 = vmatpush1.xpose.msra.mxu0 %v464
      %466 = vmatprep.subr.mxu0 0.0
      %v467 = vand.u32 %v419, 4294901760
      %468 = vmatpush1.xpose.msra.mxu0 %v467
      %469 = vmatprep.subr.mxu0 0.0
      %v470 = vand.u32 %v422, 4294901760
      %471 = vmatpush1.xpose.msra.mxu0 %v470
      %472 = vmatprep.subr.mxu0 0.0
      %v473 = vand.u32 %v425, 4294901760
      %474 = vmatpush1.xpose.msra.mxu0 %v473
      %475 = vmatprep.subr.mxu0 0.0
      %v476 = vand.u32 %v428, 4294901760
      %477 = vmatpush1.xpose.msra.mxu0 %v476
      %478 = vmatprep.subr.mxu0 0.0
      %v479 = vand.u32 %v431, 4294901760
      %480 = vmatpush1.xpose.msra.mxu0 %v479
      %481 = vmatprep.subr.mxu0 0.0
      %v482 = vand.u32 %v434, 4294901760
      %483 = vmatpush1.xpose.msra.mxu0 %v482
      %484 = vmatprep.subr.mxu0 0.0
      %v485 = vand.u32 %v437, 4294901760
      %486 = vmatpush1.xpose.msra.mxu0 %v485
      %487 = vmatprep.subr.mxu0 0.0
      %488 = vmatpush1.xpose.msra.mxu0 0.0
      %489 = vmatprep.subr.mxu0 0.0
      %490 = vmatpush1.xpose.msra.mxu0 0.0
      %491 = vmatprep.subr.mxu0 0.0
      %492 = vmatpush1.xpose.msra.mxu0 0.0
      %493 = vmatprep.subr.mxu0 0.0
      %494 = vmatpush1.xpose.msra.mxu0 0.0
      %495 = vmatprep.subr.mxu0 0.0
      %496 = vmatpush1.xpose.msra.mxu0 0.0
      %497 = vmatprep.subr.mxu0 0.0
      %498 = vmatpush1.xpose.msra.mxu0 0.0
      %499 = vmatprep.subr.mxu0 0.0
      %500 = vmatpush1.xpose.msra.mxu0 0.0
      %501 = vmatprep.subr.mxu0 0.0
      %502 = vmatpush1.xpose.msra.mxu0 0.0
      %503 = vmatprep.subr.mxu0 0.0
      %504 = vmatpush1.xpose.msra.mxu0 0.0
      %505 = vmatprep.subr.mxu0 0.0
      %506 = vmatpush1.xpose.msra.mxu0 0.0
      %507 = vmatprep.subr.mxu0 0.0
      %508 = vmatpush1.xpose.msra.mxu0 0.0
      %509 = vmatprep.subr.mxu0 0.0
      %510 = vmatpush1.xpose.msra.mxu0 0.0
      %511 = vmatprep.subr.mxu0 0.0
      %512 = vmatpush1.xpose.msra.mxu0 0.0
      %513 = vmatprep.subr.mxu0 0.0
      %514 = vmatpush1.xpose.msra.mxu0 0.0
      %515 = vmatprep.subr.mxu0 0.0
      %516 = vmatpush1.xpose.msra.mxu0 0.0
      %517 = vmatprep.subr.mxu0 0.0
      %518 = vmatpush1.xpose.msra.mxu0 0.0
      %519 = vmatprep.mubr.f32.mxu0 0.0
      %v520 = vand.u32 %v368, 4294901760
      %v521 = vsub.f32 %v368, %v520
      %v522 = vand.u32 %v521, 4294901760
      %v523 = vsub.f32 %v521, %v522
      %v524 = vand.u32 %v523, 4294901760
      %525 = vmatmul.mubr.f32.gmra.mrb[0].mxu0 %v524
      %v526 = vpop.f32.mrb[0].mxu0
      %v527 = vadd.f32 0.0, %v526
      %v528 = vpop.f32.mrb[0].mxu0
      %529 = vmatprep.mubr.f32.mxu0 0.0
      %v530 = vand.u32 %v371, 4294901760
      %v531 = vsub.f32 %v371, %v530
      %v532 = vand.u32 %v531, 4294901760
      %v533 = vsub.f32 %v531, %v532
      %v534 = vand.u32 %v533, 4294901760
      %535 = vmatmul.mubr.f32.gmra.mrb[0].mxu0 %v534
      %v536 = vpop.f32.mrb[0].mxu0
      %v537 = vadd.f32 0.0, %v536
      %v538 = vpop.f32.mrb[0].mxu0
      %539 = vmatprep.mubr.f32.mxu0 0.0
      %v540 = vand.u32 %v374, 4294901760
      %v541 = vsub.f32 %v374, %v540
      %v542 = vand.u32 %v541, 4294901760
      %v543 = vsub.f32 %v541, %v542
      %v544 = vand.u32 %v543, 4294901760
      %545 = vmatmul.mubr.f32.gmra.mrb[0].mxu0 %v544
      %v546 = vpop.f32.mrb[0].mxu0
      %v547 = vadd.f32 0.0, %v546
      %v548 = vpop.f32.mrb[0].mxu0
      %549 = vmatprep.mubr.f32.mxu0 0.0
      %v550 = vand.u32 %v377, 4294901760
      %v551 = vsub.f32 %v377, %v550
      %v552 = vand.u32 %v551, 4294901760
      %v553 = vsub.f32 %v551, %v552
      %v554 = vand.u32 %v553, 4294901760
      %555 = vmatmul.mubr.f32.gmra.mrb[0].mxu0 %v554
      %v556 = vpop.f32.mrb[0].mxu0
      %v557 = vadd.f32 0.0, %v556
      %v558 = vpop.f32.mrb[0].mxu0
      %559 = vmatprep.mubr.f32.mxu0 0.0
      %v560 = vand.u32 %v380, 4294901760
      %v561 = vsub.f32 %v380, %v560
      %v562 = vand.u32 %v561, 4294901760
      %v563 = vsub.f32 %v561, %v562
      %v564 = vand.u32 %v563, 4294901760
      %565 = vmatmul.mubr.f32.gmra.mrb[0].mxu0 %v564
      %v566 = vpop.f32.mrb[0].mxu0
      %v567 = vadd.f32 0.0, %v566
      %v568 = vpop.f32.mrb[0].mxu0
      %569 = vmatprep.mubr.f32.mxu0 0.0
      %v570 = vand.u32 %v383, 4294901760
      %v571 = vsub.f32 %v383, %v570
      %v572 = vand.u32 %v571, 4294901760
      %v573 = vsub.f32 %v571, %v572
      %v574 = vand.u32 %v573, 4294901760
      %575 = vmatmul.mubr.f32.gmra.mrb[0].mxu0 %v574
      %v576 = vpop.f32.mrb[0].mxu0
      %v577 = vadd.f32 0.0, %v576
      %v578 = vpop.f32.mrb[0].mxu0
      %579 = vmatprep.mubr.f32.mxu0 0.0
      %v580 = vand.u32 %v386, 4294901760
      %v581 = vsub.f32 %v386, %v580
      %v582 = vand.u32 %v581, 4294901760
      %v583 = vsub.f32 %v581, %v582
      %v584 = vand.u32 %v583, 4294901760
      %585 = vmatmul.mubr.f32.gmra.mrb[0].mxu0 %v584
      %v586 = vpop.f32.mrb[0].mxu0
      %v587 = vadd.f32 0.0, %v586
      %v588 = vpop.f32.mrb[0].mxu0
      %589 = vmatprep.mubr.f32.mxu0 0.0
      %v590 = vand.u32 %v389, 4294901760
      %v591 = vsub.f32 %v389, %v590
      %v592 = vand.u32 %v591, 4294901760
      %v593 = vsub.f32 %v591, %v592
      %v594 = vand.u32 %v593, 4294901760
      %595 = vmatmul.mubr.f32.gmra.mrb[0].mxu0 %v594
      %v596 = vpop.f32.mrb[0].mxu0
      %v597 = vadd.f32 0.0, %v596
      %v598 = vpop.f32.mrb[0].mxu0
      %599 = vdwg.mxu0
      %600 = vmatprep.subr.mxu0 0.0
      %v601 = vand.u32 %v392, 4294901760
      %v602 = vsub.f32 %v392, %v601
      %v603 = vand.u32 %v602, 4294901760
      %v604 = vsub.f32 %v602, %v603
      %v605 = vand.u32 %v604, 4294901760
      %606 = vmatpush1.xpose.msra.mxu0 %v605
      %607 = vmatprep.subr.mxu0 0.0
      %v608 = vand.u32 %v395, 4294901760
      %v609 = vsub.f32 %v395, %v608
      %v610 = vand.u32 %v609, 4294901760
      %v611 = vsub.f32 %v609, %v610
      %v612 = vand.u32 %v611, 4294901760
      %613 = vmatpush1.xpose.msra.mxu0 %v612
      %614 = vmatprep.subr.mxu0 0.0
      %v615 = vand.u32 %v398, 4294901760
      %v616 = vsub.f32 %v398, %v615
      %v617 = vand.u32 %v616, 4294901760
      %v618 = vsub.f32 %v616, %v617
      %v619 = vand.u32 %v618, 4294901760
      %620 = vmatpush1.xpose.msra.mxu0 %v619
      %621 = vmatprep.subr.mxu0 0.0
      %v622 = vand.u32 %v401, 4294901760
      %v623 = vsub.f32 %v401, %v622
      %v624 = vand.u32 %v623, 4294901760
      %v625 = vsub.f32 %v623, %v624
      %v626 = vand.u32 %v625, 4294901760
      %627 = vmatpush1.xpose.msra.mxu0 %v626
      %628 = vmatprep.subr.mxu0 0.0
      %v629 = vand.u32 %v404, 4294901760
      %v630 = vsub.f32 %v404, %v629
      %v631 = vand.u32 %v630, 4294901760
      %v632 = vsub.f32 %v630, %v631
      %v633 = vand.u32 %v632, 4294901760
      %634 = vmatpush1.xpose.msra.mxu0 %v633
      %635 = vmatprep.subr.mxu0 0.0
      %v636 = vand.u32 %v407, 4294901760
      %v637 = vsub.f32 %v407, %v636
      %v638 = vand.u32 %v637, 4294901760
      %v639 = vsub.f32 %v637, %v638
      %v640 = vand.u32 %v639, 4294901760
      %641 = vmatpush1.xpose.msra.mxu0 %v640
      %642 = vmatprep.subr.mxu0 0.0
      %v643 = vand.u32 %v410, 4294901760
      %v644 = vsub.f32 %v410, %v643
      %v645 = vand.u32 %v644, 4294901760
      %v646 = vsub.f32 %v644, %v645
      %v647 = vand.u32 %v646, 4294901760
      %648 = vmatpush1.xpose.msra.mxu0 %v647
      %649 = vmatprep.subr.mxu0 0.0
      %v650 = vand.u32 %v413, 4294901760
      %v651 = vsub.f32 %v413, %v650
      %v652 = vand.u32 %v651, 4294901760
      %v653 = vsub.f32 %v651, %v652
      %v654 = vand.u32 %v653, 4294901760
      %655 = vmatpush1.xpose.msra.mxu0 %v654
      %656 = vmatprep.subr.mxu0 0.0
      %v657 = vand.u32 %v416, 4294901760
      %v658 = vsub.f32 %v416, %v657
      %v659 = vand.u32 %v658, 4294901760
      %v660 = vsub.f32 %v658, %v659
      %v661 = vand.u32 %v660, 4294901760
      %662 = vmatpush1.xpose.msra.mxu0 %v661
      %663 = vmatprep.subr.mxu0 0.0
      %v664 = vand.u32 %v419, 4294901760
      %v665 = vsub.f32 %v419, %v664
      %v666 = vand.u32 %v665, 4294901760
      %v667 = vsub.f32 %v665, %v666
      %v668 = vand.u32 %v667, 4294901760
      %669 = vmatpush1.xpose.msra.mxu0 %v668
      %670 = vmatprep.subr.mxu0 0.0
      %v671 = vand.u32 %v422, 4294901760
      %v672 = vsub.f32 %v422, %v671
      %v673 = vand.u32 %v672, 4294901760
      %v674 = vsub.f32 %v672, %v673
      %v675 = vand.u32 %v674, 4294901760
      %676 = vmatpush1.xpose.msra.mxu0 %v675
      %677 = vmatprep.subr.mxu0 0.0
      %v678 = vand.u32 %v425, 4294901760
      %v679 = vsub.f32 %v425, %v678
      %v680 = vand.u32 %v679, 4294901760
      %v681 = vsub.f32 %v679, %v680
      %v682 = vand.u32 %v681, 4294901760
      %683 = vmatpush1.xpose.msra.mxu0 %v682
      %684 = vmatprep.subr.mxu0 0.0
      %v685 = vand.u32 %v428, 4294901760
      %v686 = vsub.f32 %v428, %v685
      %v687 = vand.u32 %v686, 4294901760
      %v688 = vsub.f32 %v686, %v687
      %v689 = vand.u32 %v688, 4294901760
      %690 = vmatpush1.xpose.msra.mxu0 %v689
      %691 = vmatprep.subr.mxu0 0.0
      %v692 = vand.u32 %v431, 4294901760
      %v693 = vsub.f32 %v431, %v692
      %v694 = vand.u32 %v693, 4294901760
      %v695 = vsub.f32 %v693, %v694
      %v696 = vand.u32 %v695, 4294901760
      %697 = vmatpush1.xpose.msra.mxu0 %v696
      %698 = vmatprep.subr.mxu0 0.0
      %v699 = vand.u32 %v434, 4294901760
      %v700 = vsub.f32 %v434, %v699
      %v701 = vand.u32 %v700, 4294901760
      %v702 = vsub.f32 %v700, %v701
      %v703 = vand.u32 %v702, 4294901760
      %704 = vmatpush1.xpose.msra.mxu0 %v703
      %705 = vmatprep.subr.mxu0 0.0
      %v706 = vand.u32 %v437, 4294901760
      %v707 = vsub.f32 %v437, %v706
      %v708 = vand.u32 %v707, 4294901760
      %v709 = vsub.f32 %v707, %v708
      %v710 = vand.u32 %v709, 4294901760
      %711 = vmatpush1.xpose.msra.mxu0 %v710
      %712 = vmatprep.subr.mxu0 0.0
      %713 = vmatpush1.xpose.msra.mxu0 0.0
      %714 = vmatprep.subr.mxu0 0.0
      %715 = vmatpush1.xpose.msra.mxu0 0.0
      %716 = vmatprep.subr.mxu0 0.0
      %717 = vmatpush1.xpose.msra.mxu0 0.0
      %718 = vmatprep.subr.mxu0 0.0
      %719 = vmatpush1.xpose.msra.mxu0 0.0
      %720 = vmatprep.subr.mxu0 0.0
      %721 = vmatpush1.xpose.msra.mxu0 0.0
      %722 = vmatprep.subr.mxu0 0.0
      %723 = vmatpush1.xpose.msra.mxu0 0.0
      %724 = vmatprep.subr.mxu0 0.0
      %725 = vmatpush1.xpose.msra.mxu0 0.0
      %726 = vmatprep.subr.mxu0 0.0
      %727 = vmatpush1.xpose.msra.mxu0 0.0
      %728 = vmatprep.subr.mxu0 0.0
      %729 = vmatpush1.xpose.msra.mxu0 0.0
      %730 = vmatprep.subr.mxu0 0.0
      %731 = vmatpush1.xpose.msra.mxu0 0.0
      %732 = vmatprep.subr.mxu0 0.0
      %733 = vmatpush1.xpose.msra.mxu0 0.0
      %734 = vmatprep.subr.mxu0 0.0
      %735 = vmatpush1.xpose.msra.mxu0 0.0
      %736 = vmatprep.subr.mxu0 0.0
      %737 = vmatpush1.xpose.msra.mxu0 0.0
      %738 = vmatprep.subr.mxu0 0.0
      %739 = vmatpush1.xpose.msra.mxu0 0.0
      %740 = vmatprep.subr.mxu0 0.0
      %741 = vmatpush1.xpose.msra.mxu0 0.0
      %742 = vmatprep.subr.mxu0 0.0
      %743 = vmatpush1.xpose.msra.mxu0 0.0
      %744 = vmatprep.mubr.f32.mxu0 0.0
      %v745 = vand.u32 %v368, 4294901760
      %746 = vmatmul.mubr.f32.gmra.mrb[0].mxu0 %v745
      %v747 = vpop.f32.mrb[0].mxu0
      %v748 = vadd.f32 %v527, %v747
      %v749 = vpop.f32.mrb[0].mxu0
      %750 = vmatprep.mubr.f32.mxu0 0.0
      %v751 = vand.u32 %v371, 4294901760
      %752 = vmatmul.mubr.f32.gmra.mrb[0].mxu0 %v751
      %v753 = vpop.f32.mrb[0].mxu0
      %v754 = vadd.f32 %v537, %v753
      %v755 = vpop.f32.mrb[0].mxu0
      %756 = vmatprep.mubr.f32.mxu0 0.0
      %v757 = vand.u32 %v374, 4294901760
      %758 = vmatmul.mubr.f32.gmra.mrb[0].mxu0 %v757
      %v759 = vpop.f32.mrb[0].mxu0
      %v760 = vadd.f32 %v547, %v759
      %v761 = vpop.f32.mrb[0].mxu0
      %762 = vmatprep.mubr.f32.mxu0 0.0
      %v763 = vand.u32 %v377, 4294901760
      %764 = vmatmul.mubr.f32.gmra.mrb[0].mxu0 %v763
      %v765 = vpop.f32.mrb[0].mxu0
      %v766 = vadd.f32 %v557, %v765
      %v767 = vpop.f32.mrb[0].mxu0
      %768 = vmatprep.mubr.f32.mxu0 0.0
      %v769 = vand.u32 %v380, 4294901760
      %770 = vmatmul.mubr.f32.gmra.mrb[0].mxu0 %v769
      %v771 = vpop.f32.mrb[0].mxu0
      %v772 = vadd.f32 %v567, %v771
      %v773 = vpop.f32.mrb[0].mxu0
      %774 = vmatprep.mubr.f32.mxu0 0.0
      %v775 = vand.u32 %v383, 4294901760
      %776 = vmatmul.mubr.f32.gmra.mrb[0].mxu0 %v775
      %v777 = vpop.f32.mrb[0].mxu0
      %v778 = vadd.f32 %v577, %v777
      %v779 = vpop.f32.mrb[0].mxu0
      %780 = vmatprep.mubr.f32.mxu0 0.0
      %v781 = vand.u32 %v386, 4294901760
      %782 = vmatmul.mubr.f32.gmra.mrb[0].mxu0 %v781
      %v783 = vpop.f32.mrb[0].mxu0
      %v784 = vadd.f32 %v587, %v783
      %v785 = vpop.f32.mrb[0].mxu0
      %786 = vmatprep.mubr.f32.mxu0 0.0
      %v787 = vand.u32 %v389, 4294901760
      %788 = vmatmul.mubr.f32.gmra.mrb[0].mxu0 %v787
      %v789 = vpop.f32.mrb[0].mxu0
      %v790 = vadd.f32 %v597, %v789
      %v791 = vpop.f32.mrb[0].mxu0
      %792 = vdwg.mxu0
      %793 = vmatprep.subr.mxu0 0.0
      %v794 = vand.u32 %v392, 4294901760
      %v795 = vsub.f32 %v392, %v794
      %796 = vmatpush1.xpose.msra.mxu0 %v795
      %797 = vmatprep.subr.mxu0 0.0
      %v798 = vand.u32 %v395, 4294901760
      %v799 = vsub.f32 %v395, %v798
      %800 = vmatpush1.xpose.msra.mxu0 %v799
      %801 = vmatprep.subr.mxu0 0.0
      %v802 = vand.u32 %v398, 4294901760
      %v803 = vsub.f32 %v398, %v802
      %804 = vmatpush1.xpose.msra.mxu0 %v803
      %805 = vmatprep.subr.mxu0 0.0
      %v806 = vand.u32 %v401, 4294901760
      %v807 = vsub.f32 %v401, %v806
      %808 = vmatpush1.xpose.msra.mxu0 %v807
      %809 = vmatprep.subr.mxu0 0.0
      %v810 = vand.u32 %v404, 4294901760
      %v811 = vsub.f32 %v404, %v810
      %812 = vmatpush1.xpose.msra.mxu0 %v811
      %813 = vmatprep.subr.mxu0 0.0
      %v814 = vand.u32 %v407, 4294901760
      %v815 = vsub.f32 %v407, %v814
      %816 = vmatpush1.xpose.msra.mxu0 %v815
      %817 = vmatprep.subr.mxu0 0.0
      %v818 = vand.u32 %v410, 4294901760
      %v819 = vsub.f32 %v410, %v818
      %820 = vmatpush1.xpose.msra.mxu0 %v819
      %821 = vmatprep.subr.mxu0 0.0
      %v822 = vand.u32 %v413, 4294901760
      %v823 = vsub.f32 %v413, %v822
      %824 = vmatpush1.xpose.msra.mxu0 %v823
      %825 = vmatprep.subr.mxu0 0.0
      %v826 = vand.u32 %v416, 4294901760
      %v827 = vsub.f32 %v416, %v826
      %828 = vmatpush1.xpose.msra.mxu0 %v827
      %829 = vmatprep.subr.mxu0 0.0
      %v830 = vand.u32 %v419, 4294901760
      %v831 = vsub.f32 %v419, %v830
      %832 = vmatpush1.xpose.msra.mxu0 %v831
      %833 = vmatprep.subr.mxu0 0.0
      %v834 = vand.u32 %v422, 4294901760
      %v835 = vsub.f32 %v422, %v834
      %836 = vmatpush1.xpose.msra.mxu0 %v835
      %837 = vmatprep.subr.mxu0 0.0
      %v838 = vand.u32 %v425, 4294901760
      %v839 = vsub.f32 %v425, %v838
      %840 = vmatpush1.xpose.msra.mxu0 %v839
      %841 = vmatprep.subr.mxu0 0.0
      %v842 = vand.u32 %v428, 4294901760
      %v843 = vsub.f32 %v428, %v842
      %844 = vmatpush1.xpose.msra.mxu0 %v843
      %845 = vmatprep.subr.mxu0 0.0
      %v846 = vand.u32 %v431, 4294901760
      %v847 = vsub.f32 %v431, %v846
      %848 = vmatpush1.xpose.msra.mxu0 %v847
      %849 = vmatprep.subr.mxu0 0.0
      %v850 = vand.u32 %v434, 4294901760
      %v851 = vsub.f32 %v434, %v850
      %852 = vmatpush1.xpose.msra.mxu0 %v851
      %853 = vmatprep.subr.mxu0 0.0
      %v854 = vand.u32 %v437, 4294901760
      %v855 = vsub.f32 %v437, %v854
      %856 = vmatpush1.xpose.msra.mxu0 %v855
      %857 = vmatprep.subr.mxu0 0.0
      %858 = vmatpush1.xpose.msra.mxu0 0.0
      %859 = vmatprep.subr.mxu0 0.0
      %860 = vmatpush1.xpose.msra.mxu0 0.0
      %861 = vmatprep.subr.mxu0 0.0
      %862 = vmatpush1.xpose.msra.mxu0 0.0
      %863 = vmatprep.subr.mxu0 0.0
      %864 = vmatpush1.xpose.msra.mxu0 0.0
      %865 = vmatprep.subr.mxu0 0.0
      %866 = vmatpush1.xpose.msra.mxu0 0.0
      %867 = vmatprep.subr.mxu0 0.0
      %868 = vmatpush1.xpose.msra.mxu0 0.0
      %869 = vmatprep.subr.mxu0 0.0
      %870 = vmatpush1.xpose.msra.mxu0 0.0
      %871 = vmatprep.subr.mxu0 0.0
      %872 = vmatpush1.xpose.msra.mxu0 0.0
      %873 = vmatprep.subr.mxu0 0.0
      %874 = vmatpush1.xpose.msra.mxu0 0.0
      %875 = vmatprep.subr.mxu0 0.0
      %876 = vmatpush1.xpose.msra.mxu0 0.0
      %877 = vmatprep.subr.mxu0 0.0
      %878 = vmatpush1.xpose.msra.mxu0 0.0
      %879 = vmatprep.subr.mxu0 0.0
      %880 = vmatpush1.xpose.msra.mxu0 0.0
      %881 = vmatprep.subr.mxu0 0.0
      %882 = vmatpush1.xpose.msra.mxu0 0.0
      %883 = vmatprep.subr.mxu0 0.0
      %884 = vmatpush1.xpose.msra.mxu0 0.0
      %885 = vmatprep.subr.mxu0 0.0
      %886 = vmatpush1.xpose.msra.mxu0 0.0
      %887 = vmatprep.subr.mxu0 0.0
      %888 = vmatpush1.xpose.msra.mxu0 0.0
      %889 = vmatprep.mubr.f32.mxu0 0.0
      %v890 = vand.u32 %v368, 4294901760
      %v891 = vsub.f32 %v368, %v890
      %892 = vmatmul.mubr.f32.gmra.mrb[0].mxu0 %v891
      %v893 = vpop.f32.mrb[0].mxu0
      %v894 = vadd.f32 %v748, %v893
      %v895 = vpop.f32.mrb[0].mxu0
      %896 = vmatprep.mubr.f32.mxu0 0.0
      %v897 = vand.u32 %v371, 4294901760
      %v898 = vsub.f32 %v371, %v897
      %899 = vmatmul.mubr.f32.gmra.mrb[0].mxu0 %v898
      %v900 = vpop.f32.mrb[0].mxu0
      %v901 = vadd.f32 %v754, %v900
      %v902 = vpop.f32.mrb[0].mxu0
      %903 = vmatprep.mubr.f32.mxu0 0.0
      %v904 = vand.u32 %v374, 4294901760
      %v905 = vsub.f32 %v374, %v904
      %906 = vmatmul.mubr.f32.gmra.mrb[0].mxu0 %v905
      %v907 = vpop.f32.mrb[0].mxu0
      %v908 = vadd.f32 %v760, %v907
      %v909 = vpop.f32.mrb[0].mxu0
      %910 = vmatprep.mubr.f32.mxu0 0.0
      %v911 = vand.u32 %v377, 4294901760
      %v912 = vsub.f32 %v377, %v911
      %913 = vmatmul.mubr.f32.gmra.mrb[0].mxu0 %v912
      %v914 = vpop.f32.mrb[0].mxu0
      %v915 = vadd.f32 %v766, %v914
      %v916 = vpop.f32.mrb[0].mxu0
      %917 = vmatprep.mubr.f32.mxu0 0.0
      %v918 = vand.u32 %v380, 4294901760
      %v919 = vsub.f32 %v380, %v918
      %920 = vmatmul.mubr.f32.gmra.mrb[0].mxu0 %v919
      %v921 = vpop.f32.mrb[0].mxu0
      %v922 = vadd.f32 %v772, %v921
      %v923 = vpop.f32.mrb[0].mxu0
      %924 = vmatprep.mubr.f32.mxu0 0.0
      %v925 = vand.u32 %v383, 4294901760
      %v926 = vsub.f32 %v383, %v925
      %927 = vmatmul.mubr.f32.gmra.mrb[0].mxu0 %v926
      %v928 = vpop.f32.mrb[0].mxu0
      %v929 = vadd.f32 %v778, %v928
      %v930 = vpop.f32.mrb[0].mxu0
      %931 = vmatprep.mubr.f32.mxu0 0.0
      %v932 = vand.u32 %v386, 4294901760
      %v933 = vsub.f32 %v386, %v932
      %934 = vmatmul.mubr.f32.gmra.mrb[0].mxu0 %v933
      %v935 = vpop.f32.mrb[0].mxu0
      %v936 = vadd.f32 %v784, %v935
      %v937 = vpop.f32.mrb[0].mxu0
      %938 = vmatprep.mubr.f32.mxu0 0.0
      %v939 = vand.u32 %v389, 4294901760
      %v940 = vsub.f32 %v389, %v939
      %941 = vmatmul.mubr.f32.gmra.mrb[0].mxu0 %v940
      %v942 = vpop.f32.mrb[0].mxu0
      %v943 = vadd.f32 %v790, %v942
      %v944 = vpop.f32.mrb[0].mxu0
      %945 = vdwg.mxu0
      %946 = vmatprep.subr.mxu0 0.0
      %v947 = vand.u32 %v392, 4294901760
      %948 = vmatpush1.xpose.msra.mxu0 %v947
      %949 = vmatprep.subr.mxu0 0.0
      %v950 = vand.u32 %v395, 4294901760
      %951 = vmatpush1.xpose.msra.mxu0 %v950
      %952 = vmatprep.subr.mxu0 0.0
      %v953 = vand.u32 %v398, 4294901760
      %954 = vmatpush1.xpose.msra.mxu0 %v953
      %955 = vmatprep.subr.mxu0 0.0
      %v956 = vand.u32 %v401, 4294901760
      %957 = vmatpush1.xpose.msra.mxu0 %v956
      %958 = vmatprep.subr.mxu0 0.0
      %v959 = vand.u32 %v404, 4294901760
      %960 = vmatpush1.xpose.msra.mxu0 %v959
      %961 = vmatprep.subr.mxu0 0.0
      %v962 = vand.u32 %v407, 4294901760
      %963 = vmatpush1.xpose.msra.mxu0 %v962
      %964 = vmatprep.subr.mxu0 0.0
      %v965 = vand.u32 %v410, 4294901760
      %966 = vmatpush1.xpose.msra.mxu0 %v965
      %967 = vmatprep.subr.mxu0 0.0
      %v968 = vand.u32 %v413, 4294901760
      %969 = vmatpush1.xpose.msra.mxu0 %v968
      %970 = vmatprep.subr.mxu0 0.0
      %v971 = vand.u32 %v416, 4294901760
      %972 = vmatpush1.xpose.msra.mxu0 %v971
      %973 = vmatprep.subr.mxu0 0.0
      %v974 = vand.u32 %v419, 4294901760
      %975 = vmatpush1.xpose.msra.mxu0 %v974
      %976 = vmatprep.subr.mxu0 0.0
      %v977 = vand.u32 %v422, 4294901760
      %978 = vmatpush1.xpose.msra.mxu0 %v977
      %979 = vmatprep.subr.mxu0 0.0
      %v980 = vand.u32 %v425, 4294901760
      %981 = vmatpush1.xpose.msra.mxu0 %v980
      %982 = vmatprep.subr.mxu0 0.0
      %v983 = vand.u32 %v428, 4294901760
      %984 = vmatpush1.xpose.msra.mxu0 %v983
      %985 = vmatprep.subr.mxu0 0.0
      %v986 = vand.u32 %v431, 4294901760
      %987 = vmatpush1.xpose.msra.mxu0 %v986
      %988 = vmatprep.subr.mxu0 0.0
      %v989 = vand.u32 %v434, 4294901760
      %990 = vmatpush1.xpose.msra.mxu0 %v989
      %991 = vmatprep.subr.mxu0 0.0
      %v992 = vand.u32 %v437, 4294901760
      %993 = vmatpush1.xpose.msra.mxu0 %v992
      %994 = vmatprep.subr.mxu0 0.0
      %995 = vmatpush1.xpose.msra.mxu0 0.0
      %996 = vmatprep.subr.mxu0 0.0
      %997 = vmatpush1.xpose.msra.mxu0 0.0
      %998 = vmatprep.subr.mxu0 0.0
      %999 = vmatpush1.xpose.msra.mxu0 0.0
      %1000 = vmatprep.subr.mxu0 0.0
      %1001 = vmatpush1.xpose.msra.mxu0 0.0
      %1002 = vmatprep.subr.mxu0 0.0
      %1003 = vmatpush1.xpose.msra.mxu0 0.0
      %1004 = vmatprep.subr.mxu0 0.0
      %1005 = vmatpush1.xpose.msra.mxu0 0.0
      %1006 = vmatprep.subr.mxu0 0.0
      %1007 = vmatpush1.xpose.msra.mxu0 0.0
      %1008 = vmatprep.subr.mxu0 0.0
      %1009 = vmatpush1.xpose.msra.mxu0 0.0
      %1010 = vmatprep.subr.mxu0 0.0
      %1011 = vmatpush1.xpose.msra.mxu0 0.0
      %1012 = vmatprep.subr.mxu0 0.0
      %1013 = vmatpush1.xpose.msra.mxu0 0.0
      %1014 = vmatprep.subr.mxu0 0.0
      %1015 = vmatpush1.xpose.msra.mxu0 0.0
      %1016 = vmatprep.subr.mxu0 0.0
      %1017 = vmatpush1.xpose.msra.mxu0 0.0
      %1018 = vmatprep.subr.mxu0 0.0
      %1019 = vmatpush1.xpose.msra.mxu0 0.0
      %1020 = vmatprep.subr.mxu0 0.0
      %1021 = vmatpush1.xpose.msra.mxu0 0.0
      %1022 = vmatprep.subr.mxu0 0.0
      %1023 = vmatpush1.xpose.msra.mxu0 0.0
      %1024 = vmatprep.subr.mxu0 0.0
      %1025 = vmatpush1.xpose.msra.mxu0 0.0
      %1026 = vmatprep.mubr.f32.mxu0 0.0
      %v1027 = vand.u32 %v368, 4294901760
      %v1028 = vsub.f32 %v368, %v1027
      %v1029 = vand.u32 %v1028, 4294901760
      %1030 = vmatmul.mubr.f32.gmra.mrb[0].mxu0 %v1029
      %v1031 = vpop.f32.mrb[0].mxu0
      %v1032 = vadd.f32 %v894, %v1031
      %v1033 = vpop.f32.mrb[0].mxu0
      %1034 = vmatprep.mubr.f32.mxu0 0.0
      %v1035 = vand.u32 %v371, 4294901760
      %v1036 = vsub.f32 %v371, %v1035
      %v1037 = vand.u32 %v1036, 4294901760
      %1038 = vmatmul.mubr.f32.gmra.mrb[0].mxu0 %v1037
      %v1039 = vpop.f32.mrb[0].mxu0
      %v1040 = vadd.f32 %v901, %v1039
      %v1041 = vpop.f32.mrb[0].mxu0
      %1042 = vmatprep.mubr.f32.mxu0 0.0
      %v1043 = vand.u32 %v374, 4294901760
      %v1044 = vsub.f32 %v374, %v1043
      %v1045 = vand.u32 %v1044, 4294901760
      %1046 = vmatmul.mubr.f32.gmra.mrb[0].mxu0 %v1045
      %v1047 = vpop.f32.mrb[0].mxu0
      %v1048 = vadd.f32 %v908, %v1047
      %v1049 = vpop.f32.mrb[0].mxu0
      %1050 = vmatprep.mubr.f32.mxu0 0.0
      %v1051 = vand.u32 %v377, 4294901760
      %v1052 = vsub.f32 %v377, %v1051
      %v1053 = vand.u32 %v1052, 4294901760
      %1054 = vmatmul.mubr.f32.gmra.mrb[0].mxu0 %v1053
      %v1055 = vpop.f32.mrb[0].mxu0
      %v1056 = vadd.f32 %v915, %v1055
      %v1057 = vpop.f32.mrb[0].mxu0
      %1058 = vmatprep.mubr.f32.mxu0 0.0
      %v1059 = vand.u32 %v380, 4294901760
      %v1060 = vsub.f32 %v380, %v1059
      %v1061 = vand.u32 %v1060, 4294901760
      %1062 = vmatmul.mubr.f32.gmra.mrb[0].mxu0 %v1061
      %v1063 = vpop.f32.mrb[0].mxu0
      %v1064 = vadd.f32 %v922, %v1063
      %v1065 = vpop.f32.mrb[0].mxu0
      %1066 = vmatprep.mubr.f32.mxu0 0.0
      %v1067 = vand.u32 %v383, 4294901760
      %v1068 = vsub.f32 %v383, %v1067
      %v1069 = vand.u32 %v1068, 4294901760
      %1070 = vmatmul.mubr.f32.gmra.mrb[0].mxu0 %v1069
      %v1071 = vpop.f32.mrb[0].mxu0
      %v1072 = vadd.f32 %v929, %v1071
      %v1073 = vpop.f32.mrb[0].mxu0
      %1074 = vmatprep.mubr.f32.mxu0 0.0
      %v1075 = vand.u32 %v386, 4294901760
      %v1076 = vsub.f32 %v386, %v1075
      %v1077 = vand.u32 %v1076, 4294901760
      %1078 = vmatmul.mubr.f32.gmra.mrb[0].mxu0 %v1077
      %v1079 = vpop.f32.mrb[0].mxu0
      %v1080 = vadd.f32 %v936, %v1079
      %v1081 = vpop.f32.mrb[0].mxu0
      %1082 = vmatprep.mubr.f32.mxu0 0.0
      %v1083 = vand.u32 %v389, 4294901760
      %v1084 = vsub.f32 %v389, %v1083
      %v1085 = vand.u32 %v1084, 4294901760
      %1086 = vmatmul.mubr.f32.gmra.mrb[0].mxu0 %v1085
      %v1087 = vpop.f32.mrb[0].mxu0
      %v1088 = vadd.f32 %v943, %v1087
      %v1089 = vpop.f32.mrb[0].mxu0
      %1090 = vdwg.mxu0
      %1091 = vmatprep.subr.mxu0 0.0
      %v1092 = vand.u32 %v392, 4294901760
      %v1093 = vsub.f32 %v392, %v1092
      %v1094 = vand.u32 %v1093, 4294901760
      %1095 = vmatpush1.xpose.msra.mxu0 %v1094
      %1096 = vmatprep.subr.mxu0 0.0
      %v1097 = vand.u32 %v395, 4294901760
      %v1098 = vsub.f32 %v395, %v1097
      %v1099 = vand.u32 %v1098, 4294901760
      %1100 = vmatpush1.xpose.msra.mxu0 %v1099
      %1101 = vmatprep.subr.mxu0 0.0
      %v1102 = vand.u32 %v398, 4294901760
      %v1103 = vsub.f32 %v398, %v1102
      %v1104 = vand.u32 %v1103, 4294901760
      %1105 = vmatpush1.xpose.msra.mxu0 %v1104
      %1106 = vmatprep.subr.mxu0 0.0
      %v1107 = vand.u32 %v401, 4294901760
      %v1108 = vsub.f32 %v401, %v1107
      %v1109 = vand.u32 %v1108, 4294901760
      %1110 = vmatpush1.xpose.msra.mxu0 %v1109
      %1111 = vmatprep.subr.mxu0 0.0
      %v1112 = vand.u32 %v404, 4294901760
      %v1113 = vsub.f32 %v404, %v1112
      %v1114 = vand.u32 %v1113, 4294901760
      %1115 = vmatpush1.xpose.msra.mxu0 %v1114
      %1116 = vmatprep.subr.mxu0 0.0
      %v1117 = vand.u32 %v407, 4294901760
      %v1118 = vsub.f32 %v407, %v1117
      %v1119 = vand.u32 %v1118, 4294901760
      %1120 = vmatpush1.xpose.msra.mxu0 %v1119
      %1121 = vmatprep.subr.mxu0 0.0
      %v1122 = vand.u32 %v410, 4294901760
      %v1123 = vsub.f32 %v410, %v1122
      %v1124 = vand.u32 %v1123, 4294901760
      %1125 = vmatpush1.xpose.msra.mxu0 %v1124
      %1126 = vmatprep.subr.mxu0 0.0
      %v1127 = vand.u32 %v413, 4294901760
      %v1128 = vsub.f32 %v413, %v1127
      %v1129 = vand.u32 %v1128, 4294901760
      %1130 = vmatpush1.xpose.msra.mxu0 %v1129
      %1131 = vmatprep.subr.mxu0 0.0
      %v1132 = vand.u32 %v416, 4294901760
      %v1133 = vsub.f32 %v416, %v1132
      %v1134 = vand.u32 %v1133, 4294901760
      %1135 = vmatpush1.xpose.msra.mxu0 %v1134
      %1136 = vmatprep.subr.mxu0 0.0
      %v1137 = vand.u32 %v419, 4294901760
      %v1138 = vsub.f32 %v419, %v1137
      %v1139 = vand.u32 %v1138, 4294901760
      %1140 = vmatpush1.xpose.msra.mxu0 %v1139
      %1141 = vmatprep.subr.mxu0 0.0
      %v1142 = vand.u32 %v422, 4294901760
      %v1143 = vsub.f32 %v422, %v1142
      %v1144 = vand.u32 %v1143, 4294901760
      %1145 = vmatpush1.xpose.msra.mxu0 %v1144
      %1146 = vmatprep.subr.mxu0 0.0
      %v1147 = vand.u32 %v425, 4294901760
      %v1148 = vsub.f32 %v425, %v1147
      %v1149 = vand.u32 %v1148, 4294901760
      %1150 = vmatpush1.xpose.msra.mxu0 %v1149
      %1151 = vmatprep.subr.mxu0 0.0
      %v1152 = vand.u32 %v428, 4294901760
      %v1153 = vsub.f32 %v428, %v1152
      %v1154 = vand.u32 %v1153, 4294901760
      %1155 = vmatpush1.xpose.msra.mxu0 %v1154
      %1156 = vmatprep.subr.mxu0 0.0
      %v1157 = vand.u32 %v431, 4294901760
      %v1158 = vsub.f32 %v431, %v1157
      %v1159 = vand.u32 %v1158, 4294901760
      %1160 = vmatpush1.xpose.msra.mxu0 %v1159
      %1161 = vmatprep.subr.mxu0 0.0
      %v1162 = vand.u32 %v434, 4294901760
      %v1163 = vsub.f32 %v434, %v1162
      %v1164 = vand.u32 %v1163, 4294901760
      %1165 = vmatpush1.xpose.msra.mxu0 %v1164
      %1166 = vmatprep.subr.mxu0 0.0
      %v1167 = vand.u32 %v437, 4294901760
      %v1168 = vsub.f32 %v437, %v1167
      %v1169 = vand.u32 %v1168, 4294901760
      %1170 = vmatpush1.xpose.msra.mxu0 %v1169
      %1171 = vmatprep.subr.mxu0 0.0
      %1172 = vmatpush1.xpose.msra.mxu0 0.0
      %1173 = vmatprep.subr.mxu0 0.0
      %1174 = vmatpush1.xpose.msra.mxu0 0.0
      %1175 = vmatprep.subr.mxu0 0.0
      %1176 = vmatpush1.xpose.msra.mxu0 0.0
      %1177 = vmatprep.subr.mxu0 0.0
      %1178 = vmatpush1.xpose.msra.mxu0 0.0
      %1179 = vmatprep.subr.mxu0 0.0
      %1180 = vmatpush1.xpose.msra.mxu0 0.0
      %1181 = vmatprep.subr.mxu0 0.0
      %1182 = vmatpush1.xpose.msra.mxu0 0.0
      %1183 = vmatprep.subr.mxu0 0.0
      %1184 = vmatpush1.xpose.msra.mxu0 0.0
      %1185 = vmatprep.subr.mxu0 0.0
      %1186 = vmatpush1.xpose.msra.mxu0 0.0
      %1187 = vmatprep.subr.mxu0 0.0
      %1188 = vmatpush1.xpose.msra.mxu0 0.0
      %1189 = vmatprep.subr.mxu0 0.0
      %1190 = vmatpush1.xpose.msra.mxu0 0.0
      %1191 = vmatprep.subr.mxu0 0.0
      %1192 = vmatpush1.xpose.msra.mxu0 0.0
      %1193 = vmatprep.subr.mxu0 0.0
      %1194 = vmatpush1.xpose.msra.mxu0 0.0
      %1195 = vmatprep.subr.mxu0 0.0
      %1196 = vmatpush1.xpose.msra.mxu0 0.0
      %1197 = vmatprep.subr.mxu0 0.0
      %1198 = vmatpush1.xpose.msra.mxu0 0.0
      %1199 = vmatprep.subr.mxu0 0.0
      %1200 = vmatpush1.xpose.msra.mxu0 0.0
      %1201 = vmatprep.subr.mxu0 0.0
      %1202 = vmatpush1.xpose.msra.mxu0 0.0
      %1203 = vmatprep.mubr.f32.mxu0 0.0
      %v1204 = vand.u32 %v368, 4294901760
      %1205 = vmatmul.mubr.f32.gmra.mrb[0].mxu0 %v1204
      %v1206 = vpop.f32.mrb[0].mxu0
      %v1207 = vadd.f32 %v1032, %v1206
      %v1208 = vpop.f32.mrb[0].mxu0
      %1209 = vmatprep.mubr.f32.mxu0 0.0
      %v1210 = vand.u32 %v371, 4294901760
      %1211 = vmatmul.mubr.f32.gmra.mrb[0].mxu0 %v1210
      %v1212 = vpop.f32.mrb[0].mxu0
      %v1213 = vadd.f32 %v1040, %v1212
      %v1214 = vpop.f32.mrb[0].mxu0
      %1215 = vmatprep.mubr.f32.mxu0 0.0
      %v1216 = vand.u32 %v374, 4294901760
      %1217 = vmatmul.mubr.f32.gmra.mrb[0].mxu0 %v1216
      %v1218 = vpop.f32.mrb[0].mxu0
      %v1219 = vadd.f32 %v1048, %v1218
      %v1220 = vpop.f32.mrb[0].mxu0
      %1221 = vmatprep.mubr.f32.mxu0 0.0
      %v1222 = vand.u32 %v377, 4294901760
      %1223 = vmatmul.mubr.f32.gmra.mrb[0].mxu0 %v1222
      %v1224 = vpop.f32.mrb[0].mxu0
      %v1225 = vadd.f32 %v1056, %v1224
      %v1226 = vpop.f32.mrb[0].mxu0
      %1227 = vmatprep.mubr.f32.mxu0 0.0
      %v1228 = vand.u32 %v380, 4294901760
      %1229 = vmatmul.mubr.f32.gmra.mrb[0].mxu0 %v1228
      %v1230 = vpop.f32.mrb[0].mxu0
      %v1231 = vadd.f32 %v1064, %v1230
      %v1232 = vpop.f32.mrb[0].mxu0
      %1233 = vmatprep.mubr.f32.mxu0 0.0
      %v1234 = vand.u32 %v383, 4294901760
      %1235 = vmatmul.mubr.f32.gmra.mrb[0].mxu0 %v1234
      %v1236 = vpop.f32.mrb[0].mxu0
      %v1237 = vadd.f32 %v1072, %v1236
      %v1238 = vpop.f32.mrb[0].mxu0
      %1239 = vmatprep.mubr.f32.mxu0 0.0
      %v1240 = vand.u32 %v386, 4294901760
      %1241 = vmatmul.mubr.f32.gmra.mrb[0].mxu0 %v1240
      %v1242 = vpop.f32.mrb[0].mxu0
      %v1243 = vadd.f32 %v1080, %v1242
      %v1244 = vpop.f32.mrb[0].mxu0
      %1245 = vmatprep.mubr.f32.mxu0 0.0
      %v1246 = vand.u32 %v389, 4294901760
      %1247 = vmatmul.mubr.f32.gmra.mrb[0].mxu0 %v1246
      %v1248 = vpop.f32.mrb[0].mxu0
      %v1249 = vadd.f32 %v1088, %v1248
      %v1250 = vpop.f32.mrb[0].mxu0
      %1251 = vdwg.mxu0
      %1252 = vmatprep.subr.mxu0 0.0
      %v1253 = vand.u32 %v392, 4294901760
      %1254 = vmatpush1.xpose.msra.mxu0 %v1253
      %1255 = vmatprep.subr.mxu0 0.0
      %v1256 = vand.u32 %v395, 4294901760
      %1257 = vmatpush1.xpose.msra.mxu0 %v1256
      %1258 = vmatprep.subr.mxu0 0.0
      %v1259 = vand.u32 %v398, 4294901760
      %1260 = vmatpush1.xpose.msra.mxu0 %v1259
      %1261 = vmatprep.subr.mxu0 0.0
      %v1262 = vand.u32 %v401, 4294901760
      %1263 = vmatpush1.xpose.msra.mxu0 %v1262
      %1264 = vmatprep.subr.mxu0 0.0
      %v1265 = vand.u32 %v404, 4294901760
      %1266 = vmatpush1.xpose.msra.mxu0 %v1265
      %1267 = vmatprep.subr.mxu0 0.0
      %v1268 = vand.u32 %v407, 4294901760
      %1269 = vmatpush1.xpose.msra.mxu0 %v1268
      %1270 = vmatprep.subr.mxu0 0.0
      %v1271 = vand.u32 %v410, 4294901760
      %1272 = vmatpush1.xpose.msra.mxu0 %v1271
      %1273 = vmatprep.subr.mxu0 0.0
      %v1274 = vand.u32 %v413, 4294901760
      %1275 = vmatpush1.xpose.msra.mxu0 %v1274
      %1276 = vmatprep.subr.mxu0 0.0
      %v1277 = vand.u32 %v416, 4294901760
      %1278 = vmatpush1.xpose.msra.mxu0 %v1277
      %1279 = vmatprep.subr.mxu0 0.0
      %v1280 = vand.u32 %v419, 4294901760
      %1281 = vmatpush1.xpose.msra.mxu0 %v1280
      %1282 = vmatprep.subr.mxu0 0.0
      %v1283 = vand.u32 %v422, 4294901760
      %1284 = vmatpush1.xpose.msra.mxu0 %v1283
      %1285 = vmatprep.subr.mxu0 0.0
      %v1286 = vand.u32 %v425, 4294901760
      %1287 = vmatpush1.xpose.msra.mxu0 %v1286
      %1288 = vmatprep.subr.mxu0 0.0
      %v1289 = vand.u32 %v428, 4294901760
      %1290 = vmatpush1.xpose.msra.mxu0 %v1289
      %1291 = vmatprep.subr.mxu0 0.0
      %v1292 = vand.u32 %v431, 4294901760
      %1293 = vmatpush1.xpose.msra.mxu0 %v1292
      %1294 = vmatprep.subr.mxu0 0.0
      %v1295 = vand.u32 %v434, 4294901760
      %1296 = vmatpush1.xpose.msra.mxu0 %v1295
      %1297 = vmatprep.subr.mxu0 0.0
      %v1298 = vand.u32 %v437, 4294901760
      %1299 = vmatpush1.xpose.msra.mxu0 %v1298
      %1300 = vmatprep.subr.mxu0 0.0
      %1301 = vmatpush1.xpose.msra.mxu0 0.0
      %1302 = vmatprep.subr.mxu0 0.0
      %1303 = vmatpush1.xpose.msra.mxu0 0.0
      %1304 = vmatprep.subr.mxu0 0.0
      %1305 = vmatpush1.xpose.msra.mxu0 0.0
      %1306 = vmatprep.subr.mxu0 0.0
      %1307 = vmatpush1.xpose.msra.mxu0 0.0
      %1308 = vmatprep.subr.mxu0 0.0
      %1309 = vmatpush1.xpose.msra.mxu0 0.0
      %1310 = vmatprep.subr.mxu0 0.0
      %1311 = vmatpush1.xpose.msra.mxu0 0.0
      %1312 = vmatprep.subr.mxu0 0.0
      %1313 = vmatpush1.xpose.msra.mxu0 0.0
      %1314 = vmatprep.subr.mxu0 0.0
      %1315 = vmatpush1.xpose.msra.mxu0 0.0
      %1316 = vmatprep.subr.mxu0 0.0
      %1317 = vmatpush1.xpose.msra.mxu0 0.0
      %1318 = vmatprep.subr.mxu0 0.0
      %1319 = vmatpush1.xpose.msra.mxu0 0.0
      %1320 = vmatprep.subr.mxu0 0.0
      %1321 = vmatpush1.xpose.msra.mxu0 0.0
      %1322 = vmatprep.subr.mxu0 0.0
      %1323 = vmatpush1.xpose.msra.mxu0 0.0
      %1324 = vmatprep.subr.mxu0 0.0
      %1325 = vmatpush1.xpose.msra.mxu0 0.0
      %1326 = vmatprep.subr.mxu0 0.0
      %1327 = vmatpush1.xpose.msra.mxu0 0.0
      %1328 = vmatprep.subr.mxu0 0.0
      %1329 = vmatpush1.xpose.msra.mxu0 0.0
      %1330 = vmatprep.subr.mxu0 0.0
      %1331 = vmatpush1.xpose.msra.mxu0 0.0
      %1332 = vmatprep.mubr.f32.mxu0 0.0
      %v1333 = vand.u32 %v368, 4294901760
      %1334 = vmatmul.mubr.f32.gmra.mrb[0].mxu0 %v1333
      %v1335 = vpop.f32.mrb[0].mxu0
      %v1336 = vadd.f32 %v1207, %v1335
      %v1337 = vpop.f32.mrb[0].mxu0
      %1338 = vmatprep.mubr.f32.mxu0 0.0
      %v1339 = vand.u32 %v371, 4294901760
      %1340 = vmatmul.mubr.f32.gmra.mrb[0].mxu0 %v1339
      %v1341 = vpop.f32.mrb[0].mxu0
      %v1342 = vadd.f32 %v1213, %v1341
      %v1343 = vpop.f32.mrb[0].mxu0
      %1344 = vmatprep.mubr.f32.mxu0 0.0
      %v1345 = vand.u32 %v374, 4294901760
      %1346 = vmatmul.mubr.f32.gmra.mrb[0].mxu0 %v1345
      %v1347 = vpop.f32.mrb[0].mxu0
      %v1348 = vadd.f32 %v1219, %v1347
      %v1349 = vpop.f32.mrb[0].mxu0
      %1350 = vmatprep.mubr.f32.mxu0 0.0
      %v1351 = vand.u32 %v377, 4294901760
      %1352 = vmatmul.mubr.f32.gmra.mrb[0].mxu0 %v1351
      %v1353 = vpop.f32.mrb[0].mxu0
      %v1354 = vadd.f32 %v1225, %v1353
      %v1355 = vpop.f32.mrb[0].mxu0
      %1356 = vmatprep.mubr.f32.mxu0 0.0
      %v1357 = vand.u32 %v380, 4294901760
      %1358 = vmatmul.mubr.f32.gmra.mrb[0].mxu0 %v1357
      %v1359 = vpop.f32.mrb[0].mxu0
      %v1360 = vadd.f32 %v1231, %v1359
      %v1361 = vpop.f32.mrb[0].mxu0
      %1362 = vmatprep.mubr.f32.mxu0 0.0
      %v1363 = vand.u32 %v383, 4294901760
      %1364 = vmatmul.mubr.f32.gmra.mrb[0].mxu0 %v1363
      %v1365 = vpop.f32.mrb[0].mxu0
      %v1366 = vadd.f32 %v1237, %v1365
      %v1367 = vpop.f32.mrb[0].mxu0
      %1368 = vmatprep.mubr.f32.mxu0 0.0
      %v1369 = vand.u32 %v386, 4294901760
      %1370 = vmatmul.mubr.f32.gmra.mrb[0].mxu0 %v1369
      %v1371 = vpop.f32.mrb[0].mxu0
      %v1372 = vadd.f32 %v1243, %v1371
      %v1373 = vpop.f32.mrb[0].mxu0
      %1374 = vmatprep.mubr.f32.mxu0 0.0
      %v1375 = vand.u32 %v389, 4294901760
      %1376 = vmatmul.mubr.f32.gmra.mrb[0].mxu0 %v1375
      %v1377 = vpop.f32.mrb[0].mxu0
      %v1378 = vadd.f32 %v1249, %v1377
      %v1379 = vpop.f32.mrb[0].mxu0
      %1380 = vdwg.mxu0
      %s1381 = smul.u32 %s18, 64
      %v1382 = vlaneseq
      %v1383 = vshrl.u32 %v1382, 7
      %v1384 = vadd.s32 %v1383, 8
      %v1385 = vadd.s32 %v1383, 16
      %v1386 = vadd.s32 %v1383, 24
      %v1387 = vadd.s32 %v1383, 32
      %v1388 = vadd.s32 %v1383, 40
      %v1389 = vadd.s32 %v1383, 48
      %v1390 = vadd.s32 %v1383, 56
      %v1391 = vstv %s1381
      %v1392 = vadd.s32 %v1391, %v1383
      %v1393 = vadd.s32 %v1391, %v1384
      %v1394 = vadd.s32 %v1391, %v1385
      %v1395 = vadd.s32 %v1391, %v1386
      %v1396 = vadd.s32 %v1391, %v1387
      %v1397 = vadd.s32 %v1391, %v1388
      %v1398 = vadd.s32 %v1391, %v1389
      %v1399 = vadd.s32 %v1391, %v1390
      %s1400 = smul.u32 %s19, 128
      %v1401 = vlaneseq
      %v1402 = vand.u32 %v1401, 127
      %v1403 = vstv %s1400
      %v1404 = vadd.s32 %v1403, %v1402
      %vm1405 = vcmp.eq.s32.totalorder %v1392, %v1404
      %vm1406 = vcmp.eq.s32.totalorder %v1393, %v1404
      %vm1407 = vcmp.eq.s32.totalorder %v1394, %v1404
      %vm1408 = vcmp.eq.s32.totalorder %v1395, %v1404
      %vm1409 = vcmp.eq.s32.totalorder %v1396, %v1404
      %vm1410 = vcmp.eq.s32.totalorder %v1397, %v1404
      %vm1411 = vcmp.eq.s32.totalorder %v1398, %v1404
      %vm1412 = vcmp.eq.s32.totalorder %v1399, %v1404
      %v1413 = vsel %vm1405, -inf, %v1336
      %v1414 = vsel %vm1406, -inf, %v1342
      %v1415 = vsel %vm1407, -inf, %v1348
      %v1416 = vsel %vm1408, -inf, %v1354
      %v1417 = vsel %vm1409, -inf, %v1360
      %v1418 = vsel %vm1410, -inf, %v1366
      %v1419 = vsel %vm1411, -inf, %v1372
      %v1420 = vsel %vm1412, -inf, %v1378
      %v1421 = vld [vmem:[#allocation2] sm:$0xff]
      %v1422 = vld [vmem:[#allocation2 + $0x8] sm:$0xff]
      %v1423 = vld [vmem:[#allocation2 + $0x10] sm:$0xff]
      %v1424 = vld [vmem:[#allocation2 + $0x18] sm:$0xff]
      %v1425 = vld [vmem:[#allocation2 + $0x20] sm:$0xff]
      %v1426 = vld [vmem:[#allocation2 + $0x28] sm:$0xff]
      %v1427 = vld [vmem:[#allocation2 + $0x30] sm:$0xff]
      %v1428 = vld [vmem:[#allocation2 + $0x38] sm:$0xff]
      %1429 = vmax.xlane.f32.xlu0 %v1413
      %v1430 = vpop.xlane.xlu0 %1429
      %1431 = vmax.xlane.f32.xlu0 %v1414
      %v1432 = vpop.xlane.xlu0 %1431
      %1433 = vmax.xlane.f32.xlu0 %v1415
      %v1434 = vpop.xlane.xlu0 %1433
      %1435 = vmax.xlane.f32.xlu0 %v1416
      %v1436 = vpop.xlane.xlu0 %1435
      %1437 = vmax.xlane.f32.xlu0 %v1417
      %v1438 = vpop.xlane.xlu0 %1437
      %1439 = vmax.xlane.f32.xlu0 %v1418
      %v1440 = vpop.xlane.xlu0 %1439
      %1441 = vmax.xlane.f32.xlu0 %v1419
      %v1442 = vpop.xlane.xlu0 %1441
      %1443 = vmax.xlane.f32.xlu0 %v1420
      %v1444 = vpop.xlane.xlu0 %1443
      %v1445 = vmax.f32 %v1421, %v1430
      %v1446 = vmax.f32 %v1422, %v1432
      %v1447 = vmax.f32 %v1423, %v1434
      %v1448 = vmax.f32 %v1424, %v1436
      %v1449 = vmax.f32 %v1425, %v1438
      %v1450 = vmax.f32 %v1426, %v1440
      %v1451 = vmax.f32 %v1427, %v1442
      %v1452 = vmax.f32 %v1428, %v1444
      %v1453 = vld [vmem:[#allocation3] sm:$0xff]
      %v1454 = vld [vmem:[#allocation3 + $0x8] sm:$0xff]
      %v1455 = vld [vmem:[#allocation3 + $0x10] sm:$0xff]
      %v1456 = vld [vmem:[#allocation3 + $0x18] sm:$0xff]
      %v1457 = vld [vmem:[#allocation3 + $0x20] sm:$0xff]
      %v1458 = vld [vmem:[#allocation3 + $0x28] sm:$0xff]
      %v1459 = vld [vmem:[#allocation3 + $0x30] sm:$0xff]
      %v1460 = vld [vmem:[#allocation3 + $0x38] sm:$0xff]
      %v1461 = vsub.f32 %v1421, %v1445
      %v1462 = vsub.f32 %v1422, %v1446
      %v1463 = vsub.f32 %v1423, %v1447
      %v1464 = vsub.f32 %v1424, %v1448
      %v1465 = vsub.f32 %v1425, %v1449
      %v1466 = vsub.f32 %v1426, %v1450
      %v1467 = vsub.f32 %v1427, %v1451
      %v1468 = vsub.f32 %v1428, %v1452
      %v1469 = vmul.f32 %v1461, 1.442695
      %v1470 = vpow.pop %v1469
      %v1471 = vmul.f32 %v1462, 1.442695
      %v1472 = vpow.pop %v1471
      %v1473 = vmul.f32 %v1463, 1.442695
      %v1474 = vpow.pop %v1473
      %v1475 = vmul.f32 %v1464, 1.442695
      %v1476 = vpow.pop %v1475
      %v1477 = vmul.f32 %v1465, 1.442695
      %v1478 = vpow.pop %v1477
      %v1479 = vmul.f32 %v1466, 1.442695
      %v1480 = vpow.pop %v1479
      %v1481 = vmul.f32 %v1467, 1.442695
      %v1482 = vpow.pop %v1481
      %v1483 = vmul.f32 %v1468, 1.442695
      %v1484 = vpow.pop %v1483
      %v1485 = vmul.f32 %v1453, %v1470
      %v1486 = vmul.f32 %v1454, %v1472
      %v1487 = vmul.f32 %v1455, %v1474
      %v1488 = vmul.f32 %v1456, %v1476
      %v1489 = vmul.f32 %v1457, %v1478
      %v1490 = vmul.f32 %v1458, %v1480
      %v1491 = vmul.f32 %v1459, %v1482
      %v1492 = vmul.f32 %v1460, %v1484
      %1494 = vset.pattern.permute.xlu0 0
      %1495 = vperm.xlu0 %1494, %v1445
      %v1496 = vpop.permute.xlu0 %1495
      %1499 = vset.pattern.permute.xlu0 0
      %1500 = vperm.xlu0 %1499, %v1446
      %v1501 = vpop.permute.xlu0 %1500
      %1504 = vset.pattern.permute.xlu0 0
      %1505 = vperm.xlu0 %1504, %v1447
      %v1506 = vpop.permute.xlu0 %1505
      %1509 = vset.pattern.permute.xlu0 0
      %1510 = vperm.xlu0 %1509, %v1448
      %v1511 = vpop.permute.xlu0 %1510
      %1514 = vset.pattern.permute.xlu0 0
      %1515 = vperm.xlu0 %1514, %v1449
      %v1516 = vpop.permute.xlu0 %1515
      %1519 = vset.pattern.permute.xlu0 0
      %1520 = vperm.xlu0 %1519, %v1450
      %v1521 = vpop.permute.xlu0 %1520
      %1524 = vset.pattern.permute.xlu0 0
      %1525 = vperm.xlu0 %1524, %v1451
      %v1526 = vpop.permute.xlu0 %1525
      %1529 = vset.pattern.permute.xlu0 0
      %1530 = vperm.xlu0 %1529, %v1452
      %v1531 = vpop.permute.xlu0 %1530
      %v1533 = vsub.f32 %v1413, %v1496
      %v1534 = vsub.f32 %v1414, %v1501
      %v1535 = vsub.f32 %v1415, %v1506
      %v1536 = vsub.f32 %v1416, %v1511
      %v1537 = vsub.f32 %v1417, %v1516
      %v1538 = vsub.f32 %v1418, %v1521
      %v1539 = vsub.f32 %v1419, %v1526
      %v1540 = vsub.f32 %v1420, %v1531
      %v1541 = vmul.f32 %v1533, 1.442695
      %v1542 = vpow.pop %v1541
      %v1543 = vmul.f32 %v1534, 1.442695
      %v1544 = vpow.pop %v1543
      %v1545 = vmul.f32 %v1535, 1.442695
      %v1546 = vpow.pop %v1545
      %v1547 = vmul.f32 %v1536, 1.442695
      %v1548 = vpow.pop %v1547
      %v1549 = vmul.f32 %v1537, 1.442695
      %v1550 = vpow.pop %v1549
      %v1551 = vmul.f32 %v1538, 1.442695
      %v1552 = vpow.pop %v1551
      %v1553 = vmul.f32 %v1539, 1.442695
      %v1554 = vpow.pop %v1553
      %v1555 = vmul.f32 %v1540, 1.442695
      %v1556 = vpow.pop %v1555
      %1557 = vadd.xlane.f32.xlu0 %v1542
      %v1558 = vpop.xlane.xlu0 %1557
      %1559 = vadd.xlane.f32.xlu0 %v1544
      %v1560 = vpop.xlane.xlu0 %1559
      %1561 = vadd.xlane.f32.xlu0 %v1546
      %v1562 = vpop.xlane.xlu0 %1561
      %1563 = vadd.xlane.f32.xlu0 %v1548
      %v1564 = vpop.xlane.xlu0 %1563
      %1565 = vadd.xlane.f32.xlu0 %v1550
      %v1566 = vpop.xlane.xlu0 %1565
      %1567 = vadd.xlane.f32.xlu0 %v1552
      %v1568 = vpop.xlane.xlu0 %1567
      %1569 = vadd.xlane.f32.xlu0 %v1554
      %v1570 = vpop.xlane.xlu0 %1569
      %1571 = vadd.xlane.f32.xlu0 %v1556
      %v1572 = vpop.xlane.xlu0 %1571
      %v1573 = vadd.f32 %v1485, %v1558
      %v1574 = vadd.f32 %v1486, %v1560
      %v1575 = vadd.f32 %v1487, %v1562
      %v1576 = vadd.f32 %v1488, %v1564
      %v1577 = vadd.f32 %v1489, %v1566
      %v1578 = vadd.f32 %v1490, %v1568
      %v1579 = vadd.f32 %v1491, %v1570
      %v1580 = vadd.f32 %v1492, %v1572
      %vm1581 = vcmask 7168
      %1582 = vst.msk [vmem:[#allocation3] sm:$0xff] %vm1581, %v1573
      %1583 = vst.msk [vmem:[#allocation3 + $0x8] sm:$0xff] %vm1581, %v1574
      %1584 = vst.msk [vmem:[#allocation3 + $0x10] sm:$0xff] %vm1581, %v1575
      %1585 = vst.msk [vmem:[#allocation3 + $0x18] sm:$0xff] %vm1581, %v1576
      %1586 = vst.msk [vmem:[#allocation3 + $0x20] sm:$0xff] %vm1581, %v1577
      %1587 = vst.msk [vmem:[#allocation3 + $0x28] sm:$0xff] %vm1581, %v1578
      %1588 = vst.msk [vmem:[#allocation3 + $0x30] sm:$0xff] %vm1581, %v1579
      %1589 = vst.msk [vmem:[#allocation3 + $0x38] sm:$0xff] %vm1581, %v1580
      %1590 = vst.msk [vmem:[#allocation2] sm:$0xff] %vm1581, %v1445
      %1591 = vst.msk [vmem:[#allocation2 + $0x8] sm:$0xff] %vm1581, %v1446
      %1592 = vst.msk [vmem:[#allocation2 + $0x10] sm:$0xff] %vm1581, %v1447
      %1593 = vst.msk [vmem:[#allocation2 + $0x18] sm:$0xff] %vm1581, %v1448
      %1594 = vst.msk [vmem:[#allocation2 + $0x20] sm:$0xff] %vm1581, %v1449
      %1595 = vst.msk [vmem:[#allocation2 + $0x28] sm:$0xff] %vm1581, %v1450
      %1596 = vst.msk [vmem:[#allocation2 + $0x30] sm:$0xff] %vm1581, %v1451
      %1597 = vst.msk [vmem:[#allocation2 + $0x38] sm:$0xff] %vm1581, %v1452
      %p1598 = scmp.eq.s32.totalorder %s19, 1
      // Predicated region
      $region37: #{tpu_custom_call.1} parent=31 // pred_check
        %p1599 = pneg %p1598
      $region38: #{tpu_custom_call.1} parent=31 // pred_check_branch
        %1601 = sbr.rel (%p1599) target = $region40
      $region39: #{tpu_custom_call.1} parent=31 // pred_region
        %v1602 = vld [vmem:[#allocation2] sm:$0xff]
        %v1603 = vld [vmem:[#allocation2 + $0x8] sm:$0xff]
        %v1604 = vld [vmem:[#allocation2 + $0x10] sm:$0xff]
        %v1605 = vld [vmem:[#allocation2 + $0x18] sm:$0xff]
        %v1606 = vld [vmem:[#allocation2 + $0x20] sm:$0xff]
        %v1607 = vld [vmem:[#allocation2 + $0x28] sm:$0xff]
        %v1608 = vld [vmem:[#allocation2 + $0x30] sm:$0xff]
        %v1609 = vld [vmem:[#allocation2 + $0x38] sm:$0xff]
        %v1610 = vld [vmem:[#allocation3] sm:$0xff]
        %v1611 = vld [vmem:[#allocation3 + $0x8] sm:$0xff]
        %v1612 = vld [vmem:[#allocation3 + $0x10] sm:$0xff]
        %v1613 = vld [vmem:[#allocation3 + $0x18] sm:$0xff]
        %v1614 = vld [vmem:[#allocation3 + $0x20] sm:$0xff]
        %v1615 = vld [vmem:[#allocation3 + $0x28] sm:$0xff]
        %v1616 = vld [vmem:[#allocation3 + $0x30] sm:$0xff]
        %v1617 = vld [vmem:[#allocation3 + $0x38] sm:$0xff]
        %v1618 = vlog2.pop %v1610
        %v1619 = vmul.f32 %v1618, 0.6931472
        %v1620 = vlog2.pop %v1611
        %v1621 = vmul.f32 %v1620, 0.6931472
        %v1622 = vlog2.pop %v1612
        %v1623 = vmul.f32 %v1622, 0.6931472
        %v1624 = vlog2.pop %v1613
        %v1625 = vmul.f32 %v1624, 0.6931472
        %v1626 = vlog2.pop %v1614
        %v1627 = vmul.f32 %v1626, 0.6931472
        %v1628 = vlog2.pop %v1615
        %v1629 = vmul.f32 %v1628, 0.6931472
        %v1630 = vlog2.pop %v1616
        %v1631 = vmul.f32 %v1630, 0.6931472
        %v1632 = vlog2.pop %v1617
        %v1633 = vmul.f32 %v1632, 0.6931472
        %v1634 = vadd.f32 %v1602, %v1619
        %v1635 = vadd.f32 %v1603, %v1621
        %v1636 = vadd.f32 %v1604, %v1623
        %v1637 = vadd.f32 %v1605, %v1625
        %v1638 = vadd.f32 %v1606, %v1627
        %v1639 = vadd.f32 %v1607, %v1629
        %v1640 = vadd.f32 %v1608, %v1631
        %v1641 = vadd.f32 %v1609, %v1633
        %v1642 = vld [vmem:[%s300] sm:$0xff]
        %v1643 = vld [vmem:[%s300 + $0x8] sm:$0xff]
        %v1644 = vld [vmem:[%s300 + $0x10] sm:$0xff]
        %v1645 = vld [vmem:[%s300 + $0x18] sm:$0xff]
        %v1646 = vld [vmem:[%s300 + $0x20] sm:$0xff]
        %v1647 = vld [vmem:[%s300 + $0x28] sm:$0xff]
        %v1648 = vld [vmem:[%s300 + $0x30] sm:$0xff]
        %v1649 = vld [vmem:[%s300 + $0x38] sm:$0xff]
        %v1650 = vmul.f32 %v342, %v1642
        %v1651 = vmul.f32 %v343, %v1643
        %v1652 = vmul.f32 %v344, %v1644
        %v1653 = vmul.f32 %v345, %v1645
        %v1654 = vmul.f32 %v346, %v1646
        %v1655 = vmul.f32 %v347, %v1647
        %v1656 = vmul.f32 %v348, %v1648
        %v1657 = vmul.f32 %v349, %v1649
        %v1658 = vsel %vm366, %v1650, 0.0
        %1659 = vadd.xlane.f32.xlu0 %v1658
        %v1660 = vpop.xlane.xlu0 %1659
        %v1661 = vsel %vm366, %v1651, 0.0
        %1662 = vadd.xlane.f32.xlu0 %v1661
        %v1663 = vpop.xlane.xlu0 %1662
        %v1664 = vsel %vm366, %v1652, 0.0
        %1665 = vadd.xlane.f32.xlu0 %v1664
        %v1666 = vpop.xlane.xlu0 %1665
        %v1667 = vsel %vm366, %v1653, 0.0
        %1668 = vadd.xlane.f32.xlu0 %v1667
        %v1669 = vpop.xlane.xlu0 %1668
        %v1670 = vsel %vm366, %v1654, 0.0
        %1671 = vadd.xlane.f32.xlu0 %v1670
        %v1672 = vpop.xlane.xlu0 %1671
        %v1673 = vsel %vm366, %v1655, 0.0
        %1674 = vadd.xlane.f32.xlu0 %v1673
        %v1675 = vpop.xlane.xlu0 %1674
        %v1676 = vsel %vm366, %v1656, 0.0
        %1677 = vadd.xlane.f32.xlu0 %v1676
        %v1678 = vpop.xlane.xlu0 %1677
        %v1679 = vsel %vm366, %v1657, 0.0
        %1680 = vadd.xlane.f32.xlu0 %v1679
        %v1681 = vpop.xlane.xlu0 %1680
        %v1682 = vsub.f32 %v1634, %v1660
        %v1683 = vsub.f32 %v1635, %v1663
        %v1684 = vsub.f32 %v1636, %v1666
        %v1685 = vsub.f32 %v1637, %v1669
        %v1686 = vsub.f32 %v1638, %v1672
        %v1687 = vsub.f32 %v1639, %v1675
        %v1688 = vsub.f32 %v1640, %v1678
        %v1689 = vsub.f32 %v1641, %v1681
        %1690 = vst.msk [vmem:[%s319] sm:$0xff] %vm1581, %v1682
        %1691 = vst.msk [vmem:[%s319 + $0x8] sm:$0xff] %vm1581, %v1683
        %1692 = vst.msk [vmem:[%s319 + $0x10] sm:$0xff] %vm1581, %v1684
        %1693 = vst.msk [vmem:[%s319 + $0x18] sm:$0xff] %vm1581, %v1685
        %1694 = vst.msk [vmem:[%s319 + $0x20] sm:$0xff] %vm1581, %v1686
        %1695 = vst.msk [vmem:[%s319 + $0x28] sm:$0xff] %vm1581, %v1687
        %1696 = vst.msk [vmem:[%s319 + $0x30] sm:$0xff] %vm1581, %v1688
        %1697 = vst.msk [vmem:[%s319 + $0x38] sm:$0xff] %vm1581, %v1689
      $region40: #{tpu_custom_call.1} parent=31 // pred_fallthru
        _
      %s1698 = smul.u32 8, %s18
      %p1699 = scmp.lt.s32.totalorder %s1698, 31
      %s1700 = scalar_select %p1699, %s1698, 31
      %s1701 = smul.addr %s1700, 8
      %s1702 = scalar_lea.vmem %s3, %s1701
      // Predicated region
      $region41: #{tpu_custom_call.1} parent=31 // pred_check
        %p1703 = pneg %p148
      $region42: #{tpu_custom_call.1} parent=31 // pred_check_branch
        %1705 = sbr.rel (%p1703) target = $region44
      $region43: #{tpu_custom_call.1} parent=31 // pred_region
        %s1706 = smul.u32 8, %s18
      $region44: #{tpu_custom_call.1} parent=31 // pred_fallthru
        _
    $region32: #{tpu_custom_call.1} parent=5 // pred_fallthru
      _
    %p1707 = scmp.le.s32.totalorder 2, %s9
    // Predicated region
    $region45: #{tpu_custom_call.1} parent=5 // pred_check
      %p1708 = pneg %p1707
    $region46: #{tpu_custom_call.1} parent=5 // pred_check_branch
      %1710 = sbr.rel (%p1708) target = $region48
    $region47: #{tpu_custom_call.1} parent=5 // pred_region
      %s1711 = ssub.s32 %s9, 2
      // Predicated region
      $region49: #{tpu_custom_call.1} parent=47 // pred_check
        %p1712 = pneg %p154
      $region50: #{tpu_custom_call.1} parent=47 // pred_check_branch
        %1714 = sbr.rel (%p1712) target = $region52
      $region51: #{tpu_custom_call.1} parent=47 // pred_region
        %s1715 = smul.u32 8, %s20
        %p1716 = scmp.lt.s32.totalorder %s1715, 31
        %s1717 = scalar_select %p1716, %s1715, 31
        %s1718 = smul.addr %s1717, 8
        %s1719 = scalar_lea.vmem %s3, %s1718
      $region52: #{tpu_custom_call.1} parent=47 // pred_fallthru
        _
    $region48: #{tpu_custom_call.1} parent=5 // pred_fallthru
      _
  $region6: #{tpu_custom_call.1} parent=0 // loop_footer
    %s13 = sadd.s32 1, %s9
  $region7: #{tpu_custom_call.1} parent=0 // loop_footer_branch
    %8 = sbr.rel target = $region3
  $region8: #{tpu_custom_call.1} parent=0 // loop_exit
    _

</llo_original>
